<compile_context>
chip_gen: v6e
topology: v6e:2x2x1
jax: 0.10.0
libtpu: 0.0.40
codegen_flags: <defaults>
</compile_context>

<pallas_src>
import math
import jax
import jax.numpy as jnp
from jax import lax
from jax.experimental import pallas as pl
from jax.experimental.pallas import tpu as pltpu

# ---- model hyper-parameters (small, consistent with a BERT-style encoder) ----
B = 2            # batch
S = 8            # sequence length
H = 32           # hidden size
NUM_HEADS = 2
HEAD_DIM = H // NUM_HEADS
FFN = 4 * H
VOCAB = 64
NUM_LAYERS = 2
NUM_CLASSES = 4
CPAD = 128       # lane-dense padded classifier width (logits cols 0..C-1, loss col C)
LN_EPS = 1e-12
ATTN_SCALE = 1.0 / math.sqrt(HEAD_DIM)


def _layernorm(x, g, b):
    mu = jnp.mean(x, axis=-1, keepdims=True)
    var = jnp.mean((x - mu) ** 2, axis=-1, keepdims=True)
    return (x - mu) * lax.rsqrt(var + LN_EPS) * g + b


def _bf16(x):
    return x.astype(jnp.bfloat16)


# ----------------------------- fused Pallas kernel ----------------------------

def fused_text_encoder_kernel(ids_ref, mask_ref, we_ref, pos_ref, type_ref,
                              eg_ref, eb_ref,
                              wqkv_ref, bqkv_ref, wo_ref, bo_ref,
                              ln1g_ref, ln1b_ref, w1_ref, b1_ref,
                              w2_ref, b2_ref, ln2g_ref, ln2b_ref,
                              clsw_ref, clsb_ref, lab_ref,
                              out_ref):
    # ---- embeddings in-kernel: one-hot gather on the (idle) MXU ----
    ids = ids_ref[...]                                                     # (B*S, 1) int32
    vocab_iota = lax.broadcasted_iota(jnp.int32, (B * S, VOCAB), 1)
    onehot_tok = (vocab_iota == ids).astype(jnp.float32)                   # (B*S, VOCAB)
    x = jnp.dot(onehot_tok, we_ref[...],
                preferred_element_type=jnp.float32)                        # (B*S, H)
    x = (x.reshape(B, S, H)
         + pos_ref[...][None, :, :]
         + type_ref[...][None, :, :]).reshape(B * S, H)
    x = _layernorm(x, eg_ref[...], eb_ref[...])                            # (B*S, H) f32

    # ---- hoisted attention constants (computed once, reused by every layer) ----
    bias = ((1.0 - mask_ref[...]) * (-1e9))[:, None, :]                    # (B, 1, S)
    bias_stack = jnp.concatenate([bias] * NUM_HEADS, axis=0)               # (NH*B, 1, S)
    lane = lax.broadcasted_iota(jnp.int32, (1, 1, H), 2)
    head_masks = [((lane >= h * HEAD_DIM) &
                   (lane < (h + 1) * HEAD_DIM)).astype(jnp.float32)
                  for h in range(NUM_HEADS)]                               # each (1,1,H)

    # ---- encoder layers (static unrolled loop; weights VMEM-resident) ----
    for l in range(NUM_LAYERS):
        # fused QKV projection: one (B*S, H) x (H, 3H) matmul, bf16 in / f32 acc
        qkv = jnp.dot(_bf16(x), wqkv_ref[l],
                      preferred_element_type=jnp.float32) + bqkv_ref[l]    # (B*S, 3H)
        q = qkv[:, 0:H].reshape(B, S, H)
        k = qkv[:, H:2 * H].reshape(B, S, H)
        v = qkv[:, 2 * H:3 * H].reshape(B, S, H)

        # Heads folded into the einsum batch dim via lane masks: masked K/V contribute
        # exact zeros outside their head's lanes, so per-head scores/context fall out of
        # two single-batch-dim batched einsums; no lane slices, no lane concat.
        q_stack = jnp.concatenate([q] * NUM_HEADS, axis=0)                 # (NH*B, S, H)
        k_stack = jnp.concatenate([k * m for m in head_masks], axis=0)     # (NH*B, S, H)
        v_stack = jnp.concatenate([v * m for m in head_masks], axis=0)     # (NH*B, S, H)

        s = jnp.einsum('bqd,bkd->bqk', _bf16(q_stack), _bf16(k_stack),
                       preferred_element_type=jnp.float32) * ATTN_SCALE    # (NH*B, S, S)
        s = s + bias_stack
        s = s - jnp.max(s, axis=-1, keepdims=True)
        p = jnp.exp(s)
        p = p * pl.reciprocal(jnp.sum(p, axis=-1, keepdims=True), approx=True)
        ctx_stack = jnp.einsum('bqk,bkd->bqd', _bf16(p), _bf16(v_stack),
                               preferred_element_type=jnp.float32)         # (NH*B, S, H)
        # non-head lanes of each stacked slice are exactly 0 -> summing recovers concat
        ctx = ctx_stack[0:B]
        for h in range(1, NUM_HEADS):
            ctx = ctx + ctx_stack[h * B:(h + 1) * B]
        ctx = ctx.reshape(B * S, H)

        attn_out = jnp.dot(_bf16(ctx), wo_ref[l],
                           preferred_element_type=jnp.float32) + bo_ref[l]
        x = _layernorm(x + attn_out, ln1g_ref[l], ln1b_ref[l])

        # TODO(synk): HF BERT uses exact (erf) GELU; tanh approximation used here.
        hdn = jax.nn.gelu(
            jnp.dot(_bf16(x), w1_ref[l],
                    preferred_element_type=jnp.float32) + b1_ref[l],
            approximate=True)                                              # (B*S, FFN)
        ffn_out = jnp.dot(_bf16(hdn), w2_ref[l],
                          preferred_element_type=jnp.float32) + b2_ref[l]
        x = _layernorm(x + ffn_out, ln2g_ref[l], ln2b_ref[l])

    # ---- classifier on ALL rows (lane-padded weights), then take CLS rows ----
    logits_all = jnp.dot(_bf16(x), clsw_ref[...],
                         preferred_element_type=jnp.float32) + clsb_ref[...]  # (B*S, CPAD)
    cls_logits = logits_all.reshape(B, S, CPAD)[:, 0, :]                      # (B, CPAD)

    # ---- per-example CE loss (labels read as scalars from SMEM) ----
    col = lax.broadcasted_iota(jnp.int32, (B, CPAD), 1)
    row = lax.broadcasted_iota(jnp.int32, (B, CPAD), 0)
    valid = col < NUM_CLASSES
    neg = jnp.where(valid, cls_logits, -1e30)
    m = jnp.max(neg, axis=-1, keepdims=True)
    lse = jnp.log(jnp.sum(jnp.exp(neg - m), axis=-1, keepdims=True)) + m      # (B, 1)
    onehot_lab = jnp.zeros((B, CPAD), jnp.float32)
    for b in range(B):
        onehot_lab = jnp.where((row == b) & (col == lab_ref[b]), 1.0, onehot_lab)
    picked = jnp.sum(onehot_lab * cls_logits, axis=-1, keepdims=True)         # (B, 1)
    loss = lse - picked                                                        # (B, 1)

    # ---- single lane-dense (B, 128) output slab: logits | loss | zeros ----
    out_ref[...] = jnp.where(valid, cls_logits,
                             jnp.where(col == NUM_CLASSES, loss, 0.0))


# --------------------------- parameter construction ---------------------------

def init_params(key):
    def norm(k, shape, std=0.02):
        return (std * jax.random.normal(k, shape)).astype(jnp.float32)

    keys = iter(jax.random.split(key, 4 + 6 * NUM_LAYERS))
    params = {
        "word_emb": norm(next(keys), (VOCAB, H)),
        "pos_emb":  norm(next(keys), (S, H)),
        "type_emb": norm(next(keys), (2, H)),
        "emb_ln_g": jnp.ones((1, H), jnp.float32),
        "emb_ln_b": jnp.zeros((1, H), jnp.float32),
    }
    cls_w = norm(next(keys), (H, NUM_CLASSES))
    cls_w_pad = jnp.zeros((H, CPAD), jnp.float32).at[:, :NUM_CLASSES].set(cls_w)
    params["cls_w_pad"] = cls_w_pad.astype(jnp.bfloat16)       # lane-dense classifier
    params["cls_b_pad"] = jnp.zeros((1, CPAD), jnp.float32)

    wqkv, wo, w1, w2 = [], [], [], []
    for _ in range(NUM_LAYERS):
        wq = norm(next(keys), (H, H))
        wk = norm(next(keys), (H, H))
        wv = norm(next(keys), (H, H))
        wqkv.append(jnp.concatenate([wq, wk, wv], axis=1))      # (H, 3H)
        wo.append(norm(next(keys), (H, H)))
        w1.append(norm(next(keys), (H, FFN)))
        w2.append(norm(next(keys), (FFN, H)))
    params["wqkv"] = jnp.stack(wqkv).astype(jnp.bfloat16)       # (L, H, 3H)
    params["bqkv"] = jnp.zeros((NUM_LAYERS, 1, 3 * H), jnp.float32)
    params["wo"]   = jnp.stack(wo).astype(jnp.bfloat16)         # (L, H, H)
    params["bo"]   = jnp.zeros((NUM_LAYERS, 1, H), jnp.float32)
    params["ln1_g"] = jnp.ones((NUM_LAYERS, 1, H), jnp.float32)
    params["ln1_b"] = jnp.zeros((NUM_LAYERS, 1, H), jnp.float32)
    params["w1"]   = jnp.stack(w1).astype(jnp.bfloat16)         # (L, H, FFN)
    params["b1"]   = jnp.zeros((NUM_LAYERS, 1, FFN), jnp.float32)
    params["w2"]   = jnp.stack(w2).astype(jnp.bfloat16)         # (L, FFN, H)
    params["b2"]   = jnp.zeros((NUM_LAYERS, 1, H), jnp.float32)
    params["ln2_g"] = jnp.ones((NUM_LAYERS, 1, H), jnp.float32)
    params["ln2_b"] = jnp.zeros((NUM_LAYERS, 1, H), jnp.float32)
    return params


# ------------------------------- forward wrapper -------------------------------

def text_encoder_forward(params, input_ids, attention_mask, labels=None):
    ids = input_ids.reshape(B * S, 1).astype(jnp.int32)
    mask = attention_mask.astype(jnp.float32)                   # (B, S)
    lab = (labels if labels is not None
           else jnp.zeros((B,), jnp.int32)).reshape(B).astype(jnp.int32)

    def vmem():
        return pl.BlockSpec(memory_space=pltpu.MemorySpace.VMEM)

    def smem():
        return pl.BlockSpec(memory_space=pltpu.MemorySpace.SMEM)

    args = (ids, mask, params["word_emb"], params["pos_emb"],
            params["type_emb"][0:1],
            params["emb_ln_g"], params["emb_ln_b"],
            params["wqkv"], params["bqkv"], params["wo"], params["bo"],
            params["ln1_g"], params["ln1_b"], params["w1"], params["b1"],
            params["w2"], params["b2"], params["ln2_g"], params["ln2_b"],
            params["cls_w_pad"], params["cls_b_pad"], lab)

    in_specs = [vmem() for _ in range(len(args) - 1)] + [smem()]   # labels -> SMEM

    out = pl.pallas_call(
        fused_text_encoder_kernel,
        out_shape=jax.ShapeDtypeStruct((B, CPAD), jnp.float32),
        in_specs=in_specs,
        out_specs=vmem(),
    )(*args)

    logits = out[:, :NUM_CLASSES]
    if labels is not None:
        loss = jnp.mean(out[:, NUM_CLASSES])
        return logits, loss
    return logits


if __name__ == "__main__":
    key = jax.random.PRNGKey(0)
    k_params, k_ids, k_lab = jax.random.split(key, 3)

    params = init_params(k_params)
    input_ids = jax.random.randint(k_ids, (B, S), 0, VOCAB, dtype=jnp.int32)
    attention_mask = jnp.array([[1, 1, 1, 1, 1, 1, 1, 1],
                                [1, 1, 1, 1, 1, 0, 0, 0]], dtype=jnp.int32)
    labels = jax.random.randint(k_lab, (B,), 0, NUM_CLASSES, dtype=jnp.int32)

    logits, loss = text_encoder_forward(params, input_ids, attention_mask, labels)
    jax.block_until_ready((logits, loss))
    assert logits.shape == (B, NUM_CLASSES)
    assert loss.shape == ()

    logits_only = text_encoder_forward(params, input_ids, attention_mask)
    jax.block_until_ready(logits_only)
    assert logits_only.shape == (B, NUM_CLASSES)

    print("KERNEL_OK")
</pallas_src>

<mosaic_0001>
module attributes {stable_mosaic.version = 11 : i64} {
  func.func @fused_text_encoder_kernel(%arg0: memref<16x1xi32, #tpu.memory_space<vmem>>, %arg1: memref<2x8xf32, #tpu.memory_space<vmem>>, %arg2: memref<64x32xf32, #tpu.memory_space<vmem>>, %arg3: memref<8x32xf32, #tpu.memory_space<vmem>>, %arg4: memref<1x32xf32, #tpu.memory_space<vmem>>, %arg5: memref<1x32xf32, #tpu.memory_space<vmem>>, %arg6: memref<1x32xf32, #tpu.memory_space<vmem>>, %arg7: memref<2x32x96xbf16, #tpu.memory_space<vmem>>, %arg8: memref<2x1x96xf32, #tpu.memory_space<vmem>>, %arg9: memref<2x32x32xbf16, #tpu.memory_space<vmem>>, %arg10: memref<2x1x32xf32, #tpu.memory_space<vmem>>, %arg11: memref<2x1x32xf32, #tpu.memory_space<vmem>>, %arg12: memref<2x1x32xf32, #tpu.memory_space<vmem>>, %arg13: memref<2x32x128xbf16, #tpu.memory_space<vmem>>, %arg14: memref<2x1x128xf32, #tpu.memory_space<vmem>>, %arg15: memref<2x128x32xbf16, #tpu.memory_space<vmem>>, %arg16: memref<2x1x32xf32, #tpu.memory_space<vmem>>, %arg17: memref<2x1x32xf32, #tpu.memory_space<vmem>>, %arg18: memref<2x1x32xf32, #tpu.memory_space<vmem>>, %arg19: memref<32x128xbf16, #tpu.memory_space<vmem>>, %arg20: memref<1x128xf32, #tpu.memory_space<vmem>>, %arg21: memref<2xi32, #tpu.memory_space<smem>>, %arg22: memref<2x128xf32, #tpu.memory_space<vmem>>) attributes {dimension_semantics = [], scalar_prefetch = 0 : i64, scratch_operands = 0 : i64, tpu.core_type = #tpu.core_type<tc>} {
    %c0 = arith.constant 0 : index
    %c0_0 = arith.constant 0 : index
    %0 = vector.load %arg0[%c0, %c0_0] : memref<16x1xi32, #tpu.memory_space<vmem>>, vector<16x1xi32>
    %1 = tpu.iota {dimensions = array<i32: 1>} : vector<16x64xi32>
    %2 = vector.broadcast %0 : vector<16x1xi32> to vector<16x64xi32>
    %3 = arith.cmpi eq, %1, %2 : vector<16x64xi32>
    %4 = arith.extui %3 : vector<16x64xi1> to vector<16x64xi32>
    %5 = arith.sitofp %4 : vector<16x64xi32> to vector<16x64xf32>
    %c0_1 = arith.constant 0 : index
    %c0_2 = arith.constant 0 : index
    %6 = vector.load %arg2[%c0_1, %c0_2] : memref<64x32xf32, #tpu.memory_space<vmem>>, vector<64x32xf32>
    %cst = arith.constant dense<0.000000e+00> : vector<16x32xf32>
    %7 = tpu.matmul %5, %6, %cst {dimension_numbers = #tpu.dot_dimension_numbers<[1], [0], [0], [1], [0, 0, 1, 1], [], []>} : vector<16x64xf32>, vector<64x32xf32>, vector<16x32xf32> -> vector<16x32xf32>
    %8 = vector.shape_cast %7 : vector<16x32xf32> to vector<2x8x32xf32>
    %c0_3 = arith.constant 0 : index
    %c0_4 = arith.constant 0 : index
    %9 = vector.load %arg3[%c0_3, %c0_4] : memref<8x32xf32, #tpu.memory_space<vmem>>, vector<8x32xf32>
    %10 = vector.shape_cast %9 : vector<8x32xf32> to vector<1x8x32xf32>
    %11 = vector.broadcast %10 : vector<1x8x32xf32> to vector<2x8x32xf32>
    %12 = arith.addf %8, %11 : vector<2x8x32xf32>
    %c0_5 = arith.constant 0 : index
    %c0_6 = arith.constant 0 : index
    %13 = vector.load %arg4[%c0_5, %c0_6] : memref<1x32xf32, #tpu.memory_space<vmem>>, vector<1x32xf32>
    %14 = vector.shape_cast %13 : vector<1x32xf32> to vector<1x1x32xf32>
    %15 = vector.broadcast %14 : vector<1x1x32xf32> to vector<2x8x32xf32>
    %16 = arith.addf %12, %15 : vector<2x8x32xf32>
    %17 = vector.shape_cast %16 : vector<2x8x32xf32> to vector<16x32xf32>
    %c0_7 = arith.constant 0 : index
    %c0_8 = arith.constant 0 : index
    %18 = vector.load %arg5[%c0_7, %c0_8] : memref<1x32xf32, #tpu.memory_space<vmem>>, vector<1x32xf32>
    %c0_9 = arith.constant 0 : index
    %c0_10 = arith.constant 0 : index
    %19 = vector.load %arg6[%c0_9, %c0_10] : memref<1x32xf32, #tpu.memory_space<vmem>>, vector<1x32xf32>
    %cst_11 = arith.constant dense<0.000000e+00> : vector<16xf32>
    %20 = vector.multi_reduction <add>, %17, %cst_11 [1] : vector<16x32xf32> to vector<16xf32>
    %21 = vector.shape_cast %20 : vector<16xf32> to vector<16x1xf32>
    %cst_12 = arith.constant 3.200000e+01 : f32
    %22 = vector.broadcast %cst_12 : f32 to vector<16x1xf32>
    %23 = arith.divf %21, %22 : vector<16x1xf32>
    %24 = vector.broadcast %23 : vector<16x1xf32> to vector<16x32xf32>
    %25 = arith.subf %17, %24 : vector<16x32xf32>
    %26 = arith.mulf %25, %25 : vector<16x32xf32>
    %cst_13 = arith.constant dense<0.000000e+00> : vector<16xf32>
    %27 = vector.multi_reduction <add>, %26, %cst_13 [1] : vector<16x32xf32> to vector<16xf32>
    %28 = vector.shape_cast %27 : vector<16xf32> to vector<16x1xf32>
    %cst_14 = arith.constant 3.200000e+01 : f32
    %29 = vector.broadcast %cst_14 : f32 to vector<16x1xf32>
    %30 = arith.divf %28, %29 : vector<16x1xf32>
    %31 = vector.broadcast %23 : vector<16x1xf32> to vector<16x32xf32>
    %32 = arith.subf %17, %31 : vector<16x32xf32>
    %cst_15 = arith.constant 9.99999996E-13 : f32
    %33 = vector.broadcast %cst_15 : f32 to vector<16x1xf32>
    %34 = arith.addf %30, %33 : vector<16x1xf32>
    %35 = math.rsqrt %34 : vector<16x1xf32>
    %36 = vector.broadcast %35 : vector<16x1xf32> to vector<16x32xf32>
    %37 = arith.mulf %32, %36 : vector<16x32xf32>
    %38 = vector.broadcast %18 : vector<1x32xf32> to vector<16x32xf32>
    %39 = arith.mulf %37, %38 : vector<16x32xf32>
    %40 = vector.broadcast %19 : vector<1x32xf32> to vector<16x32xf32>
    %41 = arith.addf %39, %40 : vector<16x32xf32>
    %c0_16 = arith.constant 0 : index
    %c0_17 = arith.constant 0 : index
    %42 = vector.load %arg1[%c0_16, %c0_17] : memref<2x8xf32, #tpu.memory_space<vmem>>, vector<2x8xf32>
    %cst_18 = arith.constant 1.000000e+00 : f32
    %43 = vector.broadcast %cst_18 : f32 to vector<2x8xf32>
    %44 = arith.subf %43, %42 : vector<2x8xf32>
    %cst_19 = arith.constant -1.000000e+09 : f32
    %45 = vector.broadcast %cst_19 : f32 to vector<2x8xf32>
    %46 = arith.mulf %44, %45 : vector<2x8xf32>
    %47 = vector.shape_cast %46 : vector<2x8xf32> to vector<2x1x8xf32>
    %48 = tpu.concatenate %47, %47 in 0 : vector<2x1x8xf32>, vector<2x1x8xf32> -> vector<4x1x8xf32>
    %49 = tpu.iota {dimensions = array<i32: 2>} : vector<1x1x32xi32>
    %c0_i32 = arith.constant 0 : i32
    %50 = vector.broadcast %c0_i32 : i32 to vector<1x1x32xi32>
    %51 = arith.cmpi sge, %49, %50 : vector<1x1x32xi32>
    %c16_i32 = arith.constant 16 : i32
    %52 = vector.broadcast %c16_i32 : i32 to vector<1x1x32xi32>
    %53 = arith.cmpi slt, %49, %52 : vector<1x1x32xi32>
    %54 = arith.andi %51, %53 : vector<1x1x32xi1>
    %55 = arith.extui %54 : vector<1x1x32xi1> to vector<1x1x32xi32>
    %56 = arith.sitofp %55 : vector<1x1x32xi32> to vector<1x1x32xf32>
    %c16_i32_20 = arith.constant 16 : i32
    %57 = vector.broadcast %c16_i32_20 : i32 to vector<1x1x32xi32>
    %58 = arith.cmpi sge, %49, %57 : vector<1x1x32xi32>
    %c32_i32 = arith.constant 32 : i32
    %59 = vector.broadcast %c32_i32 : i32 to vector<1x1x32xi32>
    %60 = arith.cmpi slt, %49, %59 : vector<1x1x32xi32>
    %61 = arith.andi %58, %60 : vector<1x1x32xi1>
    %62 = arith.extui %61 : vector<1x1x32xi1> to vector<1x1x32xi32>
    %63 = arith.sitofp %62 : vector<1x1x32xi32> to vector<1x1x32xf32>
    %64 = arith.truncf %41 : vector<16x32xf32> to vector<16x32xbf16>
    %c0_21 = arith.constant 0 : index
    %c0_22 = arith.constant 0 : index
    %c0_23 = arith.constant 0 : index
    %65 = vector.load %arg7[%c0_21, %c0_22, %c0_23] : memref<2x32x96xbf16, #tpu.memory_space<vmem>>, vector<1x32x96xbf16>
    %66 = vector.shape_cast %65 : vector<1x32x96xbf16> to vector<32x96xbf16>
    %cst_24 = arith.constant dense<0.000000e+00> : vector<16x96xf32>
    %67 = tpu.matmul %64, %66, %cst_24 {dimension_numbers = #tpu.dot_dimension_numbers<[1], [0], [0], [1], [0, 0, 1, 1], [], []>} : vector<16x32xbf16>, vector<32x96xbf16>, vector<16x96xf32> -> vector<16x96xf32>
    %c0_25 = arith.constant 0 : index
    %c0_26 = arith.constant 0 : index
    %c0_27 = arith.constant 0 : index
    %68 = vector.load %arg8[%c0_25, %c0_26, %c0_27] : memref<2x1x96xf32, #tpu.memory_space<vmem>>, vector<1x1x96xf32>
    %69 = vector.shape_cast %68 : vector<1x1x96xf32> to vector<1x96xf32>
    %70 = vector.broadcast %69 : vector<1x96xf32> to vector<16x96xf32>
    %71 = arith.addf %67, %70 : vector<16x96xf32>
    %72 = vector.extract_strided_slice %71 {offsets = [0, 0], sizes = [16, 32], strides = [1, 1]} : vector<16x96xf32> to vector<16x32xf32>
    %73 = vector.shape_cast %72 : vector<16x32xf32> to vector<2x8x32xf32>
    %74 = vector.extract_strided_slice %71 {offsets = [0, 32], sizes = [16, 32], strides = [1, 1]} : vector<16x96xf32> to vector<16x32xf32>
    %75 = vector.shape_cast %74 : vector<16x32xf32> to vector<2x8x32xf32>
    %76 = vector.extract_strided_slice %71 {offsets = [0, 64], sizes = [16, 32], strides = [1, 1]} : vector<16x96xf32> to vector<16x32xf32>
    %77 = vector.shape_cast %76 : vector<16x32xf32> to vector<2x8x32xf32>
    %78 = tpu.concatenate %73, %73 in 0 : vector<2x8x32xf32>, vector<2x8x32xf32> -> vector<4x8x32xf32>
    %79 = vector.broadcast %56 : vector<1x1x32xf32> to vector<2x8x32xf32>
    %80 = arith.mulf %75, %79 : vector<2x8x32xf32>
    %81 = vector.broadcast %63 : vector<1x1x32xf32> to vector<2x8x32xf32>
    %82 = arith.mulf %75, %81 : vector<2x8x32xf32>
    %83 = tpu.concatenate %80, %82 in 0 : vector<2x8x32xf32>, vector<2x8x32xf32> -> vector<4x8x32xf32>
    %84 = vector.broadcast %56 : vector<1x1x32xf32> to vector<2x8x32xf32>
    %85 = arith.mulf %77, %84 : vector<2x8x32xf32>
    %86 = vector.broadcast %63 : vector<1x1x32xf32> to vector<2x8x32xf32>
    %87 = arith.mulf %77, %86 : vector<2x8x32xf32>
    %88 = tpu.concatenate %85, %87 in 0 : vector<2x8x32xf32>, vector<2x8x32xf32> -> vector<4x8x32xf32>
    %89 = arith.truncf %78 : vector<4x8x32xf32> to vector<4x8x32xbf16>
    %90 = arith.truncf %83 : vector<4x8x32xf32> to vector<4x8x32xbf16>
    "tpu.trace_start"() <{level = 10 : i32, message = "bqd,bkd->bqk"}> : () -> ()
    %cst_28 = arith.constant dense<0.000000e+00> : vector<4x8x8xf32>
    %91 = tpu.matmul %89, %90, %cst_28 {dimension_numbers = #tpu.dot_dimension_numbers<[2], [2], [1], [1], [0, 0, 0, 1, 1, 1], [0], [0]>} : vector<4x8x32xbf16>, vector<4x8x32xbf16>, vector<4x8x8xf32> -> vector<4x8x8xf32>
    "tpu.trace_stop"() : () -> ()
    %cst_29 = arith.constant 2.500000e-01 : f32
    %92 = vector.broadcast %cst_29 : f32 to vector<4x8x8xf32>
    %93 = arith.mulf %91, %92 : vector<4x8x8xf32>
    %94 = vector.broadcast %48 : vector<4x1x8xf32> to vector<4x8x8xf32>
    %95 = arith.addf %93, %94 : vector<4x8x8xf32>
    %cst_30 = arith.constant dense<0xFF800000> : vector<4x8xf32>
    %96 = vector.multi_reduction <maximumf>, %95, %cst_30 [2] : vector<4x8x8xf32> to vector<4x8xf32>
    %97 = vector.shape_cast %96 : vector<4x8xf32> to vector<4x8x1xf32>
    %98 = vector.broadcast %97 : vector<4x8x1xf32> to vector<4x8x8xf32>
    %99 = arith.subf %95, %98 : vector<4x8x8xf32>
    %100 = math.exp %99 : vector<4x8x8xf32>
    %cst_31 = arith.constant dense<0.000000e+00> : vector<4x8xf32>
    %101 = vector.multi_reduction <add>, %100, %cst_31 [2] : vector<4x8x8xf32> to vector<4x8xf32>
    %102 = vector.shape_cast %101 : vector<4x8xf32> to vector<4x8x1xf32>
    %103 = tpu.reciprocal %102 {approx = true} : vector<4x8x1xf32> -> vector<4x8x1xf32>
    %104 = vector.broadcast %103 : vector<4x8x1xf32> to vector<4x8x8xf32>
    %105 = arith.mulf %100, %104 : vector<4x8x8xf32>
    %106 = arith.truncf %105 : vector<4x8x8xf32> to vector<4x8x8xbf16>
    %107 = arith.truncf %88 : vector<4x8x32xf32> to vector<4x8x32xbf16>
    "tpu.trace_start"() <{level = 10 : i32, message = "bqk,bkd->bqd"}> : () -> ()
    %cst_32 = arith.constant dense<0.000000e+00> : vector<4x8x32xf32>
    %108 = tpu.matmul %106, %107, %cst_32 {dimension_numbers = #tpu.dot_dimension_numbers<[2], [1], [1], [2], [0, 0, 0, 1, 1, 2], [0], [0]>} : vector<4x8x8xbf16>, vector<4x8x32xbf16>, vector<4x8x32xf32> -> vector<4x8x32xf32>
    "tpu.trace_stop"() : () -> ()
    %109 = vector.extract_strided_slice %108 {offsets = [0, 0, 0], sizes = [2, 8, 32], strides = [1, 1, 1]} : vector<4x8x32xf32> to vector<2x8x32xf32>
    %110 = vector.extract_strided_slice %108 {offsets = [2, 0, 0], sizes = [2, 8, 32], strides = [1, 1, 1]} : vector<4x8x32xf32> to vector<2x8x32xf32>
    %111 = arith.addf %109, %110 : vector<2x8x32xf32>
    %112 = vector.shape_cast %111 : vector<2x8x32xf32> to vector<16x32xf32>
    %113 = arith.truncf %112 : vector<16x32xf32> to vector<16x32xbf16>
    %c0_33 = arith.constant 0 : index
    %c0_34 = arith.constant 0 : index
    %c0_35 = arith.constant 0 : index
    %114 = vector.load %arg9[%c0_33, %c0_34, %c0_35] : memref<2x32x32xbf16, #tpu.memory_space<vmem>>, vector<1x32x32xbf16>
    %115 = vector.shape_cast %114 : vector<1x32x32xbf16> to vector<32x32xbf16>
    %cst_36 = arith.constant dense<0.000000e+00> : vector<16x32xf32>
    %116 = tpu.matmul %113, %115, %cst_36 {dimension_numbers = #tpu.dot_dimension_numbers<[1], [0], [0], [1], [0, 0, 1, 1], [], []>} : vector<16x32xbf16>, vector<32x32xbf16>, vector<16x32xf32> -> vector<16x32xf32>
    %c0_37 = arith.constant 0 : index
    %c0_38 = arith.constant 0 : index
    %c0_39 = arith.constant 0 : index
    %117 = vector.load %arg10[%c0_37, %c0_38, %c0_39] : memref<2x1x32xf32, #tpu.memory_space<vmem>>, vector<1x1x32xf32>
    %118 = vector.shape_cast %117 : vector<1x1x32xf32> to vector<1x32xf32>
    %119 = vector.broadcast %118 : vector<1x32xf32> to vector<16x32xf32>
    %120 = arith.addf %116, %119 : vector<16x32xf32>
    %121 = arith.addf %41, %120 : vector<16x32xf32>
    %c0_40 = arith.constant 0 : index
    %c0_41 = arith.constant 0 : index
    %c0_42 = arith.constant 0 : index
    %122 = vector.load %arg11[%c0_40, %c0_41, %c0_42] : memref<2x1x32xf32, #tpu.memory_space<vmem>>, vector<1x1x32xf32>
    %123 = vector.shape_cast %122 : vector<1x1x32xf32> to vector<1x32xf32>
    %c0_43 = arith.constant 0 : index
    %c0_44 = arith.constant 0 : index
    %c0_45 = arith.constant 0 : index
    %124 = vector.load %arg12[%c0_43, %c0_44, %c0_45] : memref<2x1x32xf32, #tpu.memory_space<vmem>>, vector<1x1x32xf32>
    %125 = vector.shape_cast %124 : vector<1x1x32xf32> to vector<1x32xf32>
    %cst_46 = arith.constant dense<0.000000e+00> : vector<16xf32>
    %126 = vector.multi_reduction <add>, %121, %cst_46 [1] : vector<16x32xf32> to vector<16xf32>
    %127 = vector.shape_cast %126 : vector<16xf32> to vector<16x1xf32>
    %cst_47 = arith.constant 3.200000e+01 : f32
    %128 = vector.broadcast %cst_47 : f32 to vector<16x1xf32>
    %129 = arith.divf %127, %128 : vector<16x1xf32>
    %130 = vector.broadcast %129 : vector<16x1xf32> to vector<16x32xf32>
    %131 = arith.subf %121, %130 : vector<16x32xf32>
    %132 = arith.mulf %131, %131 : vector<16x32xf32>
    %cst_48 = arith.constant dense<0.000000e+00> : vector<16xf32>
    %133 = vector.multi_reduction <add>, %132, %cst_48 [1] : vector<16x32xf32> to vector<16xf32>
    %134 = vector.shape_cast %133 : vector<16xf32> to vector<16x1xf32>
    %cst_49 = arith.constant 3.200000e+01 : f32
    %135 = vector.broadcast %cst_49 : f32 to vector<16x1xf32>
    %136 = arith.divf %134, %135 : vector<16x1xf32>
    %137 = vector.broadcast %129 : vector<16x1xf32> to vector<16x32xf32>
    %138 = arith.subf %121, %137 : vector<16x32xf32>
    %cst_50 = arith.constant 9.99999996E-13 : f32
    %139 = vector.broadcast %cst_50 : f32 to vector<16x1xf32>
    %140 = arith.addf %136, %139 : vector<16x1xf32>
    %141 = math.rsqrt %140 : vector<16x1xf32>
    %142 = vector.broadcast %141 : vector<16x1xf32> to vector<16x32xf32>
    %143 = arith.mulf %138, %142 : vector<16x32xf32>
    %144 = vector.broadcast %123 : vector<1x32xf32> to vector<16x32xf32>
    %145 = arith.mulf %143, %144 : vector<16x32xf32>
    %146 = vector.broadcast %125 : vector<1x32xf32> to vector<16x32xf32>
    %147 = arith.addf %145, %146 : vector<16x32xf32>
    %148 = arith.truncf %147 : vector<16x32xf32> to vector<16x32xbf16>
    %c0_51 = arith.constant 0 : index
    %c0_52 = arith.constant 0 : index
    %c0_53 = arith.constant 0 : index
    %149 = vector.load %arg13[%c0_51, %c0_52, %c0_53] : memref<2x32x128xbf16, #tpu.memory_space<vmem>>, vector<1x32x128xbf16>
    %150 = vector.shape_cast %149 : vector<1x32x128xbf16> to vector<32x128xbf16>
    %cst_54 = arith.constant dense<0.000000e+00> : vector<16x128xf32>
    %151 = tpu.matmul %148, %150, %cst_54 {dimension_numbers = #tpu.dot_dimension_numbers<[1], [0], [0], [1], [0, 0, 1, 1], [], []>} : vector<16x32xbf16>, vector<32x128xbf16>, vector<16x128xf32> -> vector<16x128xf32>
    %c0_55 = arith.constant 0 : index
    %c0_56 = arith.constant 0 : index
    %c0_57 = arith.constant 0 : index
    %152 = vector.load %arg14[%c0_55, %c0_56, %c0_57] : memref<2x1x128xf32, #tpu.memory_space<vmem>>, vector<1x1x128xf32>
    %153 = vector.shape_cast %152 : vector<1x1x128xf32> to vector<1x128xf32>
    %154 = vector.broadcast %153 : vector<1x128xf32> to vector<16x128xf32>
    %155 = arith.addf %151, %154 : vector<16x128xf32>
    %156 = arith.mulf %155, %155 : vector<16x128xf32>
    %157 = arith.mulf %155, %156 : vector<16x128xf32>
    %cst_58 = arith.constant 4.471500e-02 : f32
    %158 = vector.broadcast %cst_58 : f32 to vector<16x128xf32>
    %159 = arith.mulf %158, %157 : vector<16x128xf32>
    %160 = arith.addf %155, %159 : vector<16x128xf32>
    %cst_59 = arith.constant 0.797884583 : f32
    %161 = vector.broadcast %cst_59 : f32 to vector<16x128xf32>
    %162 = arith.mulf %161, %160 : vector<16x128xf32>
    %163 = math.tanh %162 : vector<16x128xf32>
    %cst_60 = arith.constant 1.000000e+00 : f32
    %164 = vector.broadcast %cst_60 : f32 to vector<16x128xf32>
    %165 = arith.addf %164, %163 : vector<16x128xf32>
    %cst_61 = arith.constant 5.000000e-01 : f32
    %166 = vector.broadcast %cst_61 : f32 to vector<16x128xf32>
    %167 = arith.mulf %166, %165 : vector<16x128xf32>
    %168 = arith.mulf %155, %167 : vector<16x128xf32>
    %169 = arith.truncf %168 : vector<16x128xf32> to vector<16x128xbf16>
    %c0_62 = arith.constant 0 : index
    %c0_63 = arith.constant 0 : index
    %c0_64 = arith.constant 0 : index
    %170 = vector.load %arg15[%c0_62, %c0_63, %c0_64] : memref<2x128x32xbf16, #tpu.memory_space<vmem>>, vector<1x128x32xbf16>
    %171 = vector.shape_cast %170 : vector<1x128x32xbf16> to vector<128x32xbf16>
    %cst_65 = arith.constant dense<0.000000e+00> : vector<16x32xf32>
    %172 = tpu.matmul %169, %171, %cst_65 {dimension_numbers = #tpu.dot_dimension_numbers<[1], [0], [0], [1], [0, 0, 1, 1], [], []>} : vector<16x128xbf16>, vector<128x32xbf16>, vector<16x32xf32> -> vector<16x32xf32>
    %c0_66 = arith.constant 0 : index
    %c0_67 = arith.constant 0 : index
    %c0_68 = arith.constant 0 : index
    %173 = vector.load %arg16[%c0_66, %c0_67, %c0_68] : memref<2x1x32xf32, #tpu.memory_space<vmem>>, vector<1x1x32xf32>
    %174 = vector.shape_cast %173 : vector<1x1x32xf32> to vector<1x32xf32>
    %175 = vector.broadcast %174 : vector<1x32xf32> to vector<16x32xf32>
    %176 = arith.addf %172, %175 : vector<16x32xf32>
    %177 = arith.addf %147, %176 : vector<16x32xf32>
    %c0_69 = arith.constant 0 : index
    %c0_70 = arith.constant 0 : index
    %c0_71 = arith.constant 0 : index
    %178 = vector.load %arg17[%c0_69, %c0_70, %c0_71] : memref<2x1x32xf32, #tpu.memory_space<vmem>>, vector<1x1x32xf32>
    %179 = vector.shape_cast %178 : vector<1x1x32xf32> to vector<1x32xf32>
    %c0_72 = arith.constant 0 : index
    %c0_73 = arith.constant 0 : index
    %c0_74 = arith.constant 0 : index
    %180 = vector.load %arg18[%c0_72, %c0_73, %c0_74] : memref<2x1x32xf32, #tpu.memory_space<vmem>>, vector<1x1x32xf32>
    %181 = vector.shape_cast %180 : vector<1x1x32xf32> to vector<1x32xf32>
    %cst_75 = arith.constant dense<0.000000e+00> : vector<16xf32>
    %182 = vector.multi_reduction <add>, %177, %cst_75 [1] : vector<16x32xf32> to vector<16xf32>
    %183 = vector.shape_cast %182 : vector<16xf32> to vector<16x1xf32>
    %cst_76 = arith.constant 3.200000e+01 : f32
    %184 = vector.broadcast %cst_76 : f32 to vector<16x1xf32>
    %185 = arith.divf %183, %184 : vector<16x1xf32>
    %186 = vector.broadcast %185 : vector<16x1xf32> to vector<16x32xf32>
    %187 = arith.subf %177, %186 : vector<16x32xf32>
    %188 = arith.mulf %187, %187 : vector<16x32xf32>
    %cst_77 = arith.constant dense<0.000000e+00> : vector<16xf32>
    %189 = vector.multi_reduction <add>, %188, %cst_77 [1] : vector<16x32xf32> to vector<16xf32>
    %190 = vector.shape_cast %189 : vector<16xf32> to vector<16x1xf32>
    %cst_78 = arith.constant 3.200000e+01 : f32
    %191 = vector.broadcast %cst_78 : f32 to vector<16x1xf32>
    %192 = arith.divf %190, %191 : vector<16x1xf32>
    %193 = vector.broadcast %185 : vector<16x1xf32> to vector<16x32xf32>
    %194 = arith.subf %177, %193 : vector<16x32xf32>
    %cst_79 = arith.constant 9.99999996E-13 : f32
    %195 = vector.broadcast %cst_79 : f32 to vector<16x1xf32>
    %196 = arith.addf %192, %195 : vector<16x1xf32>
    %197 = math.rsqrt %196 : vector<16x1xf32>
    %198 = vector.broadcast %197 : vector<16x1xf32> to vector<16x32xf32>
    %199 = arith.mulf %194, %198 : vector<16x32xf32>
    %200 = vector.broadcast %179 : vector<1x32xf32> to vector<16x32xf32>
    %201 = arith.mulf %199, %200 : vector<16x32xf32>
    %202 = vector.broadcast %181 : vector<1x32xf32> to vector<16x32xf32>
    %203 = arith.addf %201, %202 : vector<16x32xf32>
    %204 = arith.truncf %203 : vector<16x32xf32> to vector<16x32xbf16>
    %c1 = arith.constant 1 : index
    %c0_80 = arith.constant 0 : index
    %c0_81 = arith.constant 0 : index
    %205 = vector.load %arg7[%c1, %c0_80, %c0_81] : memref<2x32x96xbf16, #tpu.memory_space<vmem>>, vector<1x32x96xbf16>
    %206 = vector.shape_cast %205 : vector<1x32x96xbf16> to vector<32x96xbf16>
    %cst_82 = arith.constant dense<0.000000e+00> : vector<16x96xf32>
    %207 = tpu.matmul %204, %206, %cst_82 {dimension_numbers = #tpu.dot_dimension_numbers<[1], [0], [0], [1], [0, 0, 1, 1], [], []>} : vector<16x32xbf16>, vector<32x96xbf16>, vector<16x96xf32> -> vector<16x96xf32>
    %c1_83 = arith.constant 1 : index
    %c0_84 = arith.constant 0 : index
    %c0_85 = arith.constant 0 : index
    %208 = vector.load %arg8[%c1_83, %c0_84, %c0_85] : memref<2x1x96xf32, #tpu.memory_space<vmem>>, vector<1x1x96xf32>
    %209 = vector.shape_cast %208 : vector<1x1x96xf32> to vector<1x96xf32>
    %210 = vector.broadcast %209 : vector<1x96xf32> to vector<16x96xf32>
    %211 = arith.addf %207, %210 : vector<16x96xf32>
    %212 = vector.extract_strided_slice %211 {offsets = [0, 0], sizes = [16, 32], strides = [1, 1]} : vector<16x96xf32> to vector<16x32xf32>
    %213 = vector.shape_cast %212 : vector<16x32xf32> to vector<2x8x32xf32>
    %214 = vector.extract_strided_slice %211 {offsets = [0, 32], sizes = [16, 32], strides = [1, 1]} : vector<16x96xf32> to vector<16x32xf32>
    %215 = vector.shape_cast %214 : vector<16x32xf32> to vector<2x8x32xf32>
    %216 = vector.extract_strided_slice %211 {offsets = [0, 64], sizes = [16, 32], strides = [1, 1]} : vector<16x96xf32> to vector<16x32xf32>
    %217 = vector.shape_cast %216 : vector<16x32xf32> to vector<2x8x32xf32>
    %218 = tpu.concatenate %213, %213 in 0 : vector<2x8x32xf32>, vector<2x8x32xf32> -> vector<4x8x32xf32>
    %219 = vector.broadcast %56 : vector<1x1x32xf32> to vector<2x8x32xf32>
    %220 = arith.mulf %215, %219 : vector<2x8x32xf32>
    %221 = vector.broadcast %63 : vector<1x1x32xf32> to vector<2x8x32xf32>
    %222 = arith.mulf %215, %221 : vector<2x8x32xf32>
    %223 = tpu.concatenate %220, %222 in 0 : vector<2x8x32xf32>, vector<2x8x32xf32> -> vector<4x8x32xf32>
    %224 = vector.broadcast %56 : vector<1x1x32xf32> to vector<2x8x32xf32>
    %225 = arith.mulf %217, %224 : vector<2x8x32xf32>
    %226 = vector.broadcast %63 : vector<1x1x32xf32> to vector<2x8x32xf32>
    %227 = arith.mulf %217, %226 : vector<2x8x32xf32>
    %228 = tpu.concatenate %225, %227 in 0 : vector<2x8x32xf32>, vector<2x8x32xf32> -> vector<4x8x32xf32>
    %229 = arith.truncf %218 : vector<4x8x32xf32> to vector<4x8x32xbf16>
    %230 = arith.truncf %223 : vector<4x8x32xf32> to vector<4x8x32xbf16>
    "tpu.trace_start"() <{level = 10 : i32, message = "bqd,bkd->bqk"}> : () -> ()
    %cst_86 = arith.constant dense<0.000000e+00> : vector<4x8x8xf32>
    %231 = tpu.matmul %229, %230, %cst_86 {dimension_numbers = #tpu.dot_dimension_numbers<[2], [2], [1], [1], [0, 0, 0, 1, 1, 1], [0], [0]>} : vector<4x8x32xbf16>, vector<4x8x32xbf16>, vector<4x8x8xf32> -> vector<4x8x8xf32>
    "tpu.trace_stop"() : () -> ()
    %cst_87 = arith.constant 2.500000e-01 : f32
    %232 = vector.broadcast %cst_87 : f32 to vector<4x8x8xf32>
    %233 = arith.mulf %231, %232 : vector<4x8x8xf32>
    %234 = vector.broadcast %48 : vector<4x1x8xf32> to vector<4x8x8xf32>
    %235 = arith.addf %233, %234 : vector<4x8x8xf32>
    %cst_88 = arith.constant dense<0xFF800000> : vector<4x8xf32>
    %236 = vector.multi_reduction <maximumf>, %235, %cst_88 [2] : vector<4x8x8xf32> to vector<4x8xf32>
    %237 = vector.shape_cast %236 : vector<4x8xf32> to vector<4x8x1xf32>
    %238 = vector.broadcast %237 : vector<4x8x1xf32> to vector<4x8x8xf32>
    %239 = arith.subf %235, %238 : vector<4x8x8xf32>
    %240 = math.exp %239 : vector<4x8x8xf32>
    %cst_89 = arith.constant dense<0.000000e+00> : vector<4x8xf32>
    %241 = vector.multi_reduction <add>, %240, %cst_89 [2] : vector<4x8x8xf32> to vector<4x8xf32>
    %242 = vector.shape_cast %241 : vector<4x8xf32> to vector<4x8x1xf32>
    %243 = tpu.reciprocal %242 {approx = true} : vector<4x8x1xf32> -> vector<4x8x1xf32>
    %244 = vector.broadcast %243 : vector<4x8x1xf32> to vector<4x8x8xf32>
    %245 = arith.mulf %240, %244 : vector<4x8x8xf32>
    %246 = arith.truncf %245 : vector<4x8x8xf32> to vector<4x8x8xbf16>
    %247 = arith.truncf %228 : vector<4x8x32xf32> to vector<4x8x32xbf16>
    "tpu.trace_start"() <{level = 10 : i32, message = "bqk,bkd->bqd"}> : () -> ()
    %cst_90 = arith.constant dense<0.000000e+00> : vector<4x8x32xf32>
    %248 = tpu.matmul %246, %247, %cst_90 {dimension_numbers = #tpu.dot_dimension_numbers<[2], [1], [1], [2], [0, 0, 0, 1, 1, 2], [0], [0]>} : vector<4x8x8xbf16>, vector<4x8x32xbf16>, vector<4x8x32xf32> -> vector<4x8x32xf32>
    "tpu.trace_stop"() : () -> ()
    %249 = vector.extract_strided_slice %248 {offsets = [0, 0, 0], sizes = [2, 8, 32], strides = [1, 1, 1]} : vector<4x8x32xf32> to vector<2x8x32xf32>
    %250 = vector.extract_strided_slice %248 {offsets = [2, 0, 0], sizes = [2, 8, 32], strides = [1, 1, 1]} : vector<4x8x32xf32> to vector<2x8x32xf32>
    %251 = arith.addf %249, %250 : vector<2x8x32xf32>
    %252 = vector.shape_cast %251 : vector<2x8x32xf32> to vector<16x32xf32>
    %253 = arith.truncf %252 : vector<16x32xf32> to vector<16x32xbf16>
    %c1_91 = arith.constant 1 : index
    %c0_92 = arith.constant 0 : index
    %c0_93 = arith.constant 0 : index
    %254 = vector.load %arg9[%c1_91, %c0_92, %c0_93] : memref<2x32x32xbf16, #tpu.memory_space<vmem>>, vector<1x32x32xbf16>
    %255 = vector.shape_cast %254 : vector<1x32x32xbf16> to vector<32x32xbf16>
    %cst_94 = arith.constant dense<0.000000e+00> : vector<16x32xf32>
    %256 = tpu.matmul %253, %255, %cst_94 {dimension_numbers = #tpu.dot_dimension_numbers<[1], [0], [0], [1], [0, 0, 1, 1], [], []>} : vector<16x32xbf16>, vector<32x32xbf16>, vector<16x32xf32> -> vector<16x32xf32>
    %c1_95 = arith.constant 1 : index
    %c0_96 = arith.constant 0 : index
    %c0_97 = arith.constant 0 : index
    %257 = vector.load %arg10[%c1_95, %c0_96, %c0_97] : memref<2x1x32xf32, #tpu.memory_space<vmem>>, vector<1x1x32xf32>
    %258 = vector.shape_cast %257 : vector<1x1x32xf32> to vector<1x32xf32>
    %259 = vector.broadcast %258 : vector<1x32xf32> to vector<16x32xf32>
    %260 = arith.addf %256, %259 : vector<16x32xf32>
    %261 = arith.addf %203, %260 : vector<16x32xf32>
    %c1_98 = arith.constant 1 : index
    %c0_99 = arith.constant 0 : index
    %c0_100 = arith.constant 0 : index
    %262 = vector.load %arg11[%c1_98, %c0_99, %c0_100] : memref<2x1x32xf32, #tpu.memory_space<vmem>>, vector<1x1x32xf32>
    %263 = vector.shape_cast %262 : vector<1x1x32xf32> to vector<1x32xf32>
    %c1_101 = arith.constant 1 : index
    %c0_102 = arith.constant 0 : index
    %c0_103 = arith.constant 0 : index
    %264 = vector.load %arg12[%c1_101, %c0_102, %c0_103] : memref<2x1x32xf32, #tpu.memory_space<vmem>>, vector<1x1x32xf32>
    %265 = vector.shape_cast %264 : vector<1x1x32xf32> to vector<1x32xf32>
    %cst_104 = arith.constant dense<0.000000e+00> : vector<16xf32>
    %266 = vector.multi_reduction <add>, %261, %cst_104 [1] : vector<16x32xf32> to vector<16xf32>
    %267 = vector.shape_cast %266 : vector<16xf32> to vector<16x1xf32>
    %cst_105 = arith.constant 3.200000e+01 : f32
    %268 = vector.broadcast %cst_105 : f32 to vector<16x1xf32>
    %269 = arith.divf %267, %268 : vector<16x1xf32>
    %270 = vector.broadcast %269 : vector<16x1xf32> to vector<16x32xf32>
    %271 = arith.subf %261, %270 : vector<16x32xf32>
    %272 = arith.mulf %271, %271 : vector<16x32xf32>
    %cst_106 = arith.constant dense<0.000000e+00> : vector<16xf32>
    %273 = vector.multi_reduction <add>, %272, %cst_106 [1] : vector<16x32xf32> to vector<16xf32>
    %274 = vector.shape_cast %273 : vector<16xf32> to vector<16x1xf32>
    %cst_107 = arith.constant 3.200000e+01 : f32
    %275 = vector.broadcast %cst_107 : f32 to vector<16x1xf32>
    %276 = arith.divf %274, %275 : vector<16x1xf32>
    %277 = vector.broadcast %269 : vector<16x1xf32> to vector<16x32xf32>
    %278 = arith.subf %261, %277 : vector<16x32xf32>
    %cst_108 = arith.constant 9.99999996E-13 : f32
    %279 = vector.broadcast %cst_108 : f32 to vector<16x1xf32>
    %280 = arith.addf %276, %279 : vector<16x1xf32>
    %281 = math.rsqrt %280 : vector<16x1xf32>
    %282 = vector.broadcast %281 : vector<16x1xf32> to vector<16x32xf32>
    %283 = arith.mulf %278, %282 : vector<16x32xf32>
    %284 = vector.broadcast %263 : vector<1x32xf32> to vector<16x32xf32>
    %285 = arith.mulf %283, %284 : vector<16x32xf32>
    %286 = vector.broadcast %265 : vector<1x32xf32> to vector<16x32xf32>
    %287 = arith.addf %285, %286 : vector<16x32xf32>
    %288 = arith.truncf %287 : vector<16x32xf32> to vector<16x32xbf16>
    %c1_109 = arith.constant 1 : index
    %c0_110 = arith.constant 0 : index
    %c0_111 = arith.constant 0 : index
    %289 = vector.load %arg13[%c1_109, %c0_110, %c0_111] : memref<2x32x128xbf16, #tpu.memory_space<vmem>>, vector<1x32x128xbf16>
    %290 = vector.shape_cast %289 : vector<1x32x128xbf16> to vector<32x128xbf16>
    %cst_112 = arith.constant dense<0.000000e+00> : vector<16x128xf32>
    %291 = tpu.matmul %288, %290, %cst_112 {dimension_numbers = #tpu.dot_dimension_numbers<[1], [0], [0], [1], [0, 0, 1, 1], [], []>} : vector<16x32xbf16>, vector<32x128xbf16>, vector<16x128xf32> -> vector<16x128xf32>
    %c1_113 = arith.constant 1 : index
    %c0_114 = arith.constant 0 : index
    %c0_115 = arith.constant 0 : index
    %292 = vector.load %arg14[%c1_113, %c0_114, %c0_115] : memref<2x1x128xf32, #tpu.memory_space<vmem>>, vector<1x1x128xf32>
    %293 = vector.shape_cast %292 : vector<1x1x128xf32> to vector<1x128xf32>
    %294 = vector.broadcast %293 : vector<1x128xf32> to vector<16x128xf32>
    %295 = arith.addf %291, %294 : vector<16x128xf32>
    %296 = arith.mulf %295, %295 : vector<16x128xf32>
    %297 = arith.mulf %295, %296 : vector<16x128xf32>
    %cst_116 = arith.constant 4.471500e-02 : f32
    %298 = vector.broadcast %cst_116 : f32 to vector<16x128xf32>
    %299 = arith.mulf %298, %297 : vector<16x128xf32>
    %300 = arith.addf %295, %299 : vector<16x128xf32>
    %cst_117 = arith.constant 0.797884583 : f32
    %301 = vector.broadcast %cst_117 : f32 to vector<16x128xf32>
    %302 = arith.mulf %301, %300 : vector<16x128xf32>
    %303 = math.tanh %302 : vector<16x128xf32>
    %cst_118 = arith.constant 1.000000e+00 : f32
    %304 = vector.broadcast %cst_118 : f32 to vector<16x128xf32>
    %305 = arith.addf %304, %303 : vector<16x128xf32>
    %cst_119 = arith.constant 5.000000e-01 : f32
    %306 = vector.broadcast %cst_119 : f32 to vector<16x128xf32>
    %307 = arith.mulf %306, %305 : vector<16x128xf32>
    %308 = arith.mulf %295, %307 : vector<16x128xf32>
    %309 = arith.truncf %308 : vector<16x128xf32> to vector<16x128xbf16>
    %c1_120 = arith.constant 1 : index
    %c0_121 = arith.constant 0 : index
    %c0_122 = arith.constant 0 : index
    %310 = vector.load %arg15[%c1_120, %c0_121, %c0_122] : memref<2x128x32xbf16, #tpu.memory_space<vmem>>, vector<1x128x32xbf16>
    %311 = vector.shape_cast %310 : vector<1x128x32xbf16> to vector<128x32xbf16>
    %cst_123 = arith.constant dense<0.000000e+00> : vector<16x32xf32>
    %312 = tpu.matmul %309, %311, %cst_123 {dimension_numbers = #tpu.dot_dimension_numbers<[1], [0], [0], [1], [0, 0, 1, 1], [], []>} : vector<16x128xbf16>, vector<128x32xbf16>, vector<16x32xf32> -> vector<16x32xf32>
    %c1_124 = arith.constant 1 : index
    %c0_125 = arith.constant 0 : index
    %c0_126 = arith.constant 0 : index
    %313 = vector.load %arg16[%c1_124, %c0_125, %c0_126] : memref<2x1x32xf32, #tpu.memory_space<vmem>>, vector<1x1x32xf32>
    %314 = vector.shape_cast %313 : vector<1x1x32xf32> to vector<1x32xf32>
    %315 = vector.broadcast %314 : vector<1x32xf32> to vector<16x32xf32>
    %316 = arith.addf %312, %315 : vector<16x32xf32>
    %317 = arith.addf %287, %316 : vector<16x32xf32>
    %c1_127 = arith.constant 1 : index
    %c0_128 = arith.constant 0 : index
    %c0_129 = arith.constant 0 : index
    %318 = vector.load %arg17[%c1_127, %c0_128, %c0_129] : memref<2x1x32xf32, #tpu.memory_space<vmem>>, vector<1x1x32xf32>
    %319 = vector.shape_cast %318 : vector<1x1x32xf32> to vector<1x32xf32>
    %c1_130 = arith.constant 1 : index
    %c0_131 = arith.constant 0 : index
    %c0_132 = arith.constant 0 : index
    %320 = vector.load %arg18[%c1_130, %c0_131, %c0_132] : memref<2x1x32xf32, #tpu.memory_space<vmem>>, vector<1x1x32xf32>
    %321 = vector.shape_cast %320 : vector<1x1x32xf32> to vector<1x32xf32>
    %cst_133 = arith.constant dense<0.000000e+00> : vector<16xf32>
    %322 = vector.multi_reduction <add>, %317, %cst_133 [1] : vector<16x32xf32> to vector<16xf32>
    %323 = vector.shape_cast %322 : vector<16xf32> to vector<16x1xf32>
    %cst_134 = arith.constant 3.200000e+01 : f32
    %324 = vector.broadcast %cst_134 : f32 to vector<16x1xf32>
    %325 = arith.divf %323, %324 : vector<16x1xf32>
    %326 = vector.broadcast %325 : vector<16x1xf32> to vector<16x32xf32>
    %327 = arith.subf %317, %326 : vector<16x32xf32>
    %328 = arith.mulf %327, %327 : vector<16x32xf32>
    %cst_135 = arith.constant dense<0.000000e+00> : vector<16xf32>
    %329 = vector.multi_reduction <add>, %328, %cst_135 [1] : vector<16x32xf32> to vector<16xf32>
    %330 = vector.shape_cast %329 : vector<16xf32> to vector<16x1xf32>
    %cst_136 = arith.constant 3.200000e+01 : f32
    %331 = vector.broadcast %cst_136 : f32 to vector<16x1xf32>
    %332 = arith.divf %330, %331 : vector<16x1xf32>
    %333 = vector.broadcast %325 : vector<16x1xf32> to vector<16x32xf32>
    %334 = arith.subf %317, %333 : vector<16x32xf32>
    %cst_137 = arith.constant 9.99999996E-13 : f32
    %335 = vector.broadcast %cst_137 : f32 to vector<16x1xf32>
    %336 = arith.addf %332, %335 : vector<16x1xf32>
    %337 = math.rsqrt %336 : vector<16x1xf32>
    %338 = vector.broadcast %337 : vector<16x1xf32> to vector<16x32xf32>
    %339 = arith.mulf %334, %338 : vector<16x32xf32>
    %340 = vector.broadcast %319 : vector<1x32xf32> to vector<16x32xf32>
    %341 = arith.mulf %339, %340 : vector<16x32xf32>
    %342 = vector.broadcast %321 : vector<1x32xf32> to vector<16x32xf32>
    %343 = arith.addf %341, %342 : vector<16x32xf32>
    %344 = arith.truncf %343 : vector<16x32xf32> to vector<16x32xbf16>
    %c0_138 = arith.constant 0 : index
    %c0_139 = arith.constant 0 : index
    %345 = vector.load %arg19[%c0_138, %c0_139] : memref<32x128xbf16, #tpu.memory_space<vmem>>, vector<32x128xbf16>
    %cst_140 = arith.constant dense<0.000000e+00> : vector<16x128xf32>
    %346 = tpu.matmul %344, %345, %cst_140 {dimension_numbers = #tpu.dot_dimension_numbers<[1], [0], [0], [1], [0, 0, 1, 1], [], []>} : vector<16x32xbf16>, vector<32x128xbf16>, vector<16x128xf32> -> vector<16x128xf32>
    %c0_141 = arith.constant 0 : index
    %c0_142 = arith.constant 0 : index
    %347 = vector.load %arg20[%c0_141, %c0_142] : memref<1x128xf32, #tpu.memory_space<vmem>>, vector<1x128xf32>
    %348 = vector.broadcast %347 : vector<1x128xf32> to vector<16x128xf32>
    %349 = arith.addf %346, %348 : vector<16x128xf32>
    %350 = vector.shape_cast %349 : vector<16x128xf32> to vector<2x8x128xf32>
    %351 = vector.extract_strided_slice %350 {offsets = [0, 0, 0], sizes = [2, 1, 128], strides = [1, 1, 1]} : vector<2x8x128xf32> to vector<2x1x128xf32>
    %352 = vector.shape_cast %351 : vector<2x1x128xf32> to vector<2x128xf32>
    %353 = tpu.iota {dimensions = array<i32: 1>} : vector<2x128xi32>
    %354 = tpu.iota {dimensions = array<i32: 0>} : vector<2x128xi32>
    %c4_i32 = arith.constant 4 : i32
    %355 = vector.broadcast %c4_i32 : i32 to vector<2x128xi32>
    %356 = arith.cmpi slt, %353, %355 : vector<2x128xi32>
    %cst_143 = arith.constant -1.000000e+30 : f32
    %357 = vector.broadcast %cst_143 : f32 to vector<2x128xf32>
    %358 = arith.select %356, %352, %357 : vector<2x128xi1>, vector<2x128xf32>
    %cst_144 = arith.constant dense<0xFF800000> : vector<2xf32>
    %359 = vector.multi_reduction <maximumf>, %358, %cst_144 [1] : vector<2x128xf32> to vector<2xf32>
    %360 = vector.shape_cast %359 : vector<2xf32> to vector<2x1xf32>
    %361 = vector.broadcast %360 : vector<2x1xf32> to vector<2x128xf32>
    %362 = arith.subf %358, %361 : vector<2x128xf32>
    %363 = math.exp %362 : vector<2x128xf32>
    %cst_145 = arith.constant dense<0.000000e+00> : vector<2xf32>
    %364 = vector.multi_reduction <add>, %363, %cst_145 [1] : vector<2x128xf32> to vector<2xf32>
    %365 = vector.shape_cast %364 : vector<2xf32> to vector<2x1xf32>
    %366 = math.log %365 : vector<2x1xf32>
    %367 = arith.addf %366, %360 : vector<2x1xf32>
    %cst_146 = arith.constant 0.000000e+00 : f32
    %368 = vector.broadcast %cst_146 : f32 to vector<2x128xf32>
    %c0_i32_147 = arith.constant 0 : i32
    %369 = vector.broadcast %c0_i32_147 : i32 to vector<2x128xi32>
    %370 = arith.cmpi eq, %354, %369 : vector<2x128xi32>
    %c0_148 = arith.constant 0 : index
    %371 = memref.load %arg21[%c0_148] : memref<2xi32, #tpu.memory_space<smem>>
    %372 = vector.broadcast %371 : i32 to vector<2x128xi32>
    %373 = arith.cmpi eq, %353, %372 : vector<2x128xi32>
    %374 = arith.andi %370, %373 : vector<2x128xi1>
    %cst_149 = arith.constant 1.000000e+00 : f32
    %375 = vector.broadcast %cst_149 : f32 to vector<2x128xf32>
    %376 = arith.select %374, %375, %368 : vector<2x128xi1>, vector<2x128xf32>
    %c1_i32 = arith.constant 1 : i32
    %377 = vector.broadcast %c1_i32 : i32 to vector<2x128xi32>
    %378 = arith.cmpi eq, %354, %377 : vector<2x128xi32>
    %c1_150 = arith.constant 1 : index
    %379 = memref.load %arg21[%c1_150] : memref<2xi32, #tpu.memory_space<smem>>
    %380 = vector.broadcast %379 : i32 to vector<2x128xi32>
    %381 = arith.cmpi eq, %353, %380 : vector<2x128xi32>
    %382 = arith.andi %378, %381 : vector<2x128xi1>
    %cst_151 = arith.constant 1.000000e+00 : f32
    %383 = vector.broadcast %cst_151 : f32 to vector<2x128xf32>
    %384 = arith.select %382, %383, %376 : vector<2x128xi1>, vector<2x128xf32>
    %385 = arith.mulf %384, %352 : vector<2x128xf32>
    %cst_152 = arith.constant dense<0.000000e+00> : vector<2xf32>
    %386 = vector.multi_reduction <add>, %385, %cst_152 [1] : vector<2x128xf32> to vector<2xf32>
    %387 = vector.shape_cast %386 : vector<2xf32> to vector<2x1xf32>
    %388 = arith.subf %367, %387 : vector<2x1xf32>
    %c4_i32_153 = arith.constant 4 : i32
    %389 = vector.broadcast %c4_i32_153 : i32 to vector<2x128xi32>
    %390 = arith.cmpi eq, %353, %389 : vector<2x128xi32>
    %cst_154 = arith.constant 0.000000e+00 : f32
    %391 = vector.shape_cast %388 : vector<2x1xf32> to vector<2x1xf32>
    %392 = vector.broadcast %391 : vector<2x1xf32> to vector<2x128xf32>
    %393 = vector.broadcast %cst_154 : f32 to vector<2x128xf32>
    %394 = arith.select %390, %392, %393 : vector<2x128xi1>, vector<2x128xf32>
    %395 = arith.select %356, %352, %394 : vector<2x128xi1>, vector<2x128xf32>
    %c0_155 = arith.constant 0 : index
    %c0_156 = arith.constant 0 : index
    %396 = vector.load %arg22[%c0_155, %c0_156] : memref<2x128xf32, #tpu.memory_space<vmem>>, vector<2x128xf32>
    tpu.vector_store %arg22[%c0_155, %c0_156], %395 {strides = array<i32>} : memref<2x128xf32, #tpu.memory_space<vmem>>, vector<2x128xf32>,
    return
  }
}

</mosaic_0001>

<llo_original>
// kernel: tpu_custom_call.1
$region0: #{tpu_custom_call.1}
  #allocation0 [shape = 'u32[]', space=smem, size = 0x4, offset = 0x4, fixed_abs, tag = 'smem constant byte address 0x4 - core index']
  #allocation1 [shape = 'u32[144,128]{1,0:T(1,128)}', space=vmem, size = 0x12000, scoped, tag = 'internal scratch']
  %s0 = inlined_call_operand.vmem [shape: s32[16,1], index: 0, kind: input, shape index: {}]
  %s1 = inlined_call_operand.vmem [shape: f32[2,8], index: 1, kind: input, shape index: {}]
  %s2 = inlined_call_operand.vmem [shape: f32[64,32], index: 2, kind: input, shape index: {}]
  %s3 = inlined_call_operand.vmem [shape: f32[8,32], index: 3, kind: input, shape index: {}]
  %s4 = inlined_call_operand.vmem [shape: f32[1,32], index: 4, kind: input, shape index: {}]
  %s5 = inlined_call_operand.vmem [shape: f32[1,32], index: 5, kind: input, shape index: {}]
  %s6 = inlined_call_operand.vmem [shape: f32[1,32], index: 6, kind: input, shape index: {}]
  %s7 = inlined_call_operand.vmem [shape: bf16[2,32,96], index: 7, kind: input, shape index: {}]
  %s8 = inlined_call_operand.vmem [shape: f32[2,1,96], index: 8, kind: input, shape index: {}]
  %s9 = inlined_call_operand.vmem [shape: bf16[2,32,32], index: 9, kind: input, shape index: {}]
  %s10 = inlined_call_operand.vmem [shape: f32[2,1,32], index: 10, kind: input, shape index: {}]
  %s11 = inlined_call_operand.vmem [shape: f32[2,1,32], index: 11, kind: input, shape index: {}]
  %s12 = inlined_call_operand.vmem [shape: f32[2,1,32], index: 12, kind: input, shape index: {}]
  %s13 = inlined_call_operand.vmem [shape: bf16[2,32,128], index: 13, kind: input, shape index: {}]
  %s14 = inlined_call_operand.vmem [shape: f32[2,1,128], index: 14, kind: input, shape index: {}]
  %s15 = inlined_call_operand.vmem [shape: bf16[2,128,32], index: 15, kind: input, shape index: {}]
  %s16 = inlined_call_operand.vmem [shape: f32[2,1,32], index: 16, kind: input, shape index: {}]
  %s17 = inlined_call_operand.vmem [shape: f32[2,1,32], index: 17, kind: input, shape index: {}]
  %s18 = inlined_call_operand.vmem [shape: f32[2,1,32], index: 18, kind: input, shape index: {}]
  %s19 = inlined_call_operand.vmem [shape: bf16[32,128], index: 19, kind: input, shape index: {}]
  %s20 = inlined_call_operand.vmem [shape: f32[1,128], index: 20, kind: input, shape index: {}]
  %s21 = inlined_call_operand.vmem [shape: s32[2], index: 21, kind: input, shape index: {}]
  %s22 = inlined_call_operand.hbm [shape: f32[2,128], index: 22, kind: output, shape index: {}]
  %s23 = sld [smem:[#allocation0]]
  $region102: #{tpu_custom_call.1} parent=0
    _
  %s25 = ssub.s32 1, %s23
  %s26 = scalar_select 0, %s25, %s23
  $region1: #{tpu_custom_call.1} parent=0
    #allocation2 [shape = 'u8[512]{0}', space=smem, size = 0x200, scoped, tag = 'input window, operand 21, single buffered']
    #allocation3 [shape = 's32[1]{0}', space=sflag, size = 0x4, scoped, tag = 'scoped memory for tpu_custom_call.1']
    #allocation4 [shape = 's32[1]{0}', space=sflag, size = 0x4, scoped, tag = 'scoped memory for tpu_custom_call.1']
    #allocation5 [shape = 'u8[1024]{0}', space=vmem, size = 0x400, scoped, tag = 'output window, operand 0, single buffered']
    %27 = vsyncpa [#allocation4], 0
    %28 = vsyncpa [#allocation3], 0
    // Predicated region
    $region2: #{tpu_custom_call.1} parent=1 // pred_check
      _
    $region3: #{tpu_custom_call.1} parent=1 // pred_check_branch
      %30 = sbr.rel (0) target = $region5
    $region4: #{tpu_custom_call.1} parent=1 // pred_region
      _
    $region5: #{tpu_custom_call.1} parent=1 // pred_fallthru
      _
    // Predicated region
    $region6: #{tpu_custom_call.1} parent=1 // pred_check
      _
    $region7: #{tpu_custom_call.1} parent=1 // pred_check_branch
      %32 = sbr.rel (0) target = $region9
    $region8: #{tpu_custom_call.1} parent=1 // pred_region
      _
    $region9: #{tpu_custom_call.1} parent=1 // pred_fallthru
      _
    // Predicated region
    $region10: #{tpu_custom_call.1} parent=1 // pred_check
      _
    $region11: #{tpu_custom_call.1} parent=1 // pred_check_branch
      %34 = sbr.rel (0) target = $region13
    $region12: #{tpu_custom_call.1} parent=1 // pred_region
      _
    $region13: #{tpu_custom_call.1} parent=1 // pred_fallthru
      _
    // Predicated region
    $region14: #{tpu_custom_call.1} parent=1 // pred_check
      _
    $region15: #{tpu_custom_call.1} parent=1 // pred_check_branch
      %36 = sbr.rel (0) target = $region17
    $region16: #{tpu_custom_call.1} parent=1 // pred_region
      _
    $region17: #{tpu_custom_call.1} parent=1 // pred_fallthru
      _
    // Predicated region
    $region18: #{tpu_custom_call.1} parent=1 // pred_check
      _
    $region19: #{tpu_custom_call.1} parent=1 // pred_check_branch
      %38 = sbr.rel (0) target = $region21
    $region20: #{tpu_custom_call.1} parent=1 // pred_region
      _
    $region21: #{tpu_custom_call.1} parent=1 // pred_fallthru
      _
    // Predicated region
    $region22: #{tpu_custom_call.1} parent=1 // pred_check
      _
    $region23: #{tpu_custom_call.1} parent=1 // pred_check_branch
      %40 = sbr.rel (0) target = $region25
    $region24: #{tpu_custom_call.1} parent=1 // pred_region
      _
    $region25: #{tpu_custom_call.1} parent=1 // pred_fallthru
      _
    // Predicated region
    $region26: #{tpu_custom_call.1} parent=1 // pred_check
      _
    $region27: #{tpu_custom_call.1} parent=1 // pred_check_branch
      %42 = sbr.rel (0) target = $region29
    $region28: #{tpu_custom_call.1} parent=1 // pred_region
      _
    $region29: #{tpu_custom_call.1} parent=1 // pred_fallthru
      _
    // Predicated region
    $region30: #{tpu_custom_call.1} parent=1 // pred_check
      _
    $region31: #{tpu_custom_call.1} parent=1 // pred_check_branch
      %44 = sbr.rel (0) target = $region33
    $region32: #{tpu_custom_call.1} parent=1 // pred_region
      _
    $region33: #{tpu_custom_call.1} parent=1 // pred_fallthru
      _
    // Predicated region
    $region34: #{tpu_custom_call.1} parent=1 // pred_check
      _
    $region35: #{tpu_custom_call.1} parent=1 // pred_check_branch
      %46 = sbr.rel (0) target = $region37
    $region36: #{tpu_custom_call.1} parent=1 // pred_region
      _
    $region37: #{tpu_custom_call.1} parent=1 // pred_fallthru
      _
    // Predicated region
    $region38: #{tpu_custom_call.1} parent=1 // pred_check
      _
    $region39: #{tpu_custom_call.1} parent=1 // pred_check_branch
      %48 = sbr.rel (0) target = $region41
    $region40: #{tpu_custom_call.1} parent=1 // pred_region
      _
    $region41: #{tpu_custom_call.1} parent=1 // pred_fallthru
      _
    // Predicated region
    $region42: #{tpu_custom_call.1} parent=1 // pred_check
      _
    $region43: #{tpu_custom_call.1} parent=1 // pred_check_branch
      %50 = sbr.rel (0) target = $region45
    $region44: #{tpu_custom_call.1} parent=1 // pred_region
      _
    $region45: #{tpu_custom_call.1} parent=1 // pred_fallthru
      _
    // Predicated region
    $region46: #{tpu_custom_call.1} parent=1 // pred_check
      _
    $region47: #{tpu_custom_call.1} parent=1 // pred_check_branch
      %52 = sbr.rel (0) target = $region49
    $region48: #{tpu_custom_call.1} parent=1 // pred_region
      _
    $region49: #{tpu_custom_call.1} parent=1 // pred_fallthru
      _
    // Predicated region
    $region50: #{tpu_custom_call.1} parent=1 // pred_check
      _
    $region51: #{tpu_custom_call.1} parent=1 // pred_check_branch
      %54 = sbr.rel (0) target = $region53
    $region52: #{tpu_custom_call.1} parent=1 // pred_region
      _
    $region53: #{tpu_custom_call.1} parent=1 // pred_fallthru
      _
    // Predicated region
    $region54: #{tpu_custom_call.1} parent=1 // pred_check
      _
    $region55: #{tpu_custom_call.1} parent=1 // pred_check_branch
      %56 = sbr.rel (0) target = $region57
    $region56: #{tpu_custom_call.1} parent=1 // pred_region
      _
    $region57: #{tpu_custom_call.1} parent=1 // pred_fallthru
      _
    // Predicated region
    $region58: #{tpu_custom_call.1} parent=1 // pred_check
      _
    $region59: #{tpu_custom_call.1} parent=1 // pred_check_branch
      %58 = sbr.rel (0) target = $region61
    $region60: #{tpu_custom_call.1} parent=1 // pred_region
      _
    $region61: #{tpu_custom_call.1} parent=1 // pred_fallthru
      _
    // Predicated region
    $region62: #{tpu_custom_call.1} parent=1 // pred_check
      _
    $region63: #{tpu_custom_call.1} parent=1 // pred_check_branch
      %60 = sbr.rel (0) target = $region65
    $region64: #{tpu_custom_call.1} parent=1 // pred_region
      _
    $region65: #{tpu_custom_call.1} parent=1 // pred_fallthru
      _
    // Predicated region
    $region66: #{tpu_custom_call.1} parent=1 // pred_check
      _
    $region67: #{tpu_custom_call.1} parent=1 // pred_check_branch
      %62 = sbr.rel (0) target = $region69
    $region68: #{tpu_custom_call.1} parent=1 // pred_region
      _
    $region69: #{tpu_custom_call.1} parent=1 // pred_fallthru
      _
    // Predicated region
    $region70: #{tpu_custom_call.1} parent=1 // pred_check
      _
    $region71: #{tpu_custom_call.1} parent=1 // pred_check_branch
      %64 = sbr.rel (0) target = $region73
    $region72: #{tpu_custom_call.1} parent=1 // pred_region
      _
    $region73: #{tpu_custom_call.1} parent=1 // pred_fallthru
      _
    // Predicated region
    $region74: #{tpu_custom_call.1} parent=1 // pred_check
      _
    $region75: #{tpu_custom_call.1} parent=1 // pred_check_branch
      %66 = sbr.rel (0) target = $region77
    $region76: #{tpu_custom_call.1} parent=1 // pred_region
      _
    $region77: #{tpu_custom_call.1} parent=1 // pred_fallthru
      _
    // Predicated region
    $region78: #{tpu_custom_call.1} parent=1 // pred_check
      _
    $region79: #{tpu_custom_call.1} parent=1 // pred_check_branch
      %68 = sbr.rel (0) target = $region81
    $region80: #{tpu_custom_call.1} parent=1 // pred_region
      _
    $region81: #{tpu_custom_call.1} parent=1 // pred_fallthru
      _
    // Predicated region
    $region82: #{tpu_custom_call.1} parent=1 // pred_check
      _
    $region83: #{tpu_custom_call.1} parent=1 // pred_check_branch
      %70 = sbr.rel (0) target = $region85
    $region84: #{tpu_custom_call.1} parent=1 // pred_region
      _
    $region85: #{tpu_custom_call.1} parent=1 // pred_fallthru
      _
    // Predicated region
    $region86: #{tpu_custom_call.1} parent=1 // pred_check
      _
    $region87: #{tpu_custom_call.1} parent=1 // pred_check_branch
      %72 = sbr.rel (0) target = $region89
    $region88: #{tpu_custom_call.1} parent=1 // pred_region
      %s74 = ssub.s32 16, 16
      %75 = vsyncadd [#allocation4], %s74
      %s77 = sshll.u32 %s21, 4
      %s78 = int_to_ptr.vmem [resolvable:$true] %s77
      %80 = dma.vmem_to_smem %s78, 16, [#allocation2], [#allocation4]
    $region89: #{tpu_custom_call.1} parent=1 // pred_fallthru
      _
    // Predicated region
    $region90: #{tpu_custom_call.1} parent=1 // pred_check
      _
    $region91: #{tpu_custom_call.1} parent=1 // pred_check_branch
      %82 = sbr.rel (0) target = $region93
    $region92: #{tpu_custom_call.1} parent=1 // pred_region
      %83 = dma.done [#allocation4], 16
    $region93: #{tpu_custom_call.1} parent=1 // pred_fallthru
      _
    %84 = sfence
    %v86 = vld [vmem:[%s0] sm:$0xff]
    %v87 = vld [vmem:[%s0 + $0x8] sm:$0xff]
    %v88 = vlaneseq
    %v89 = vand.u32 %v88, 127
    %90 = vset.pattern.permute.xlu0 0
    %91 = vperm.xlu0 %90, %v86
    %v92 = vpop.permute.xlu0 %91
    %93 = vset.pattern.permute.xlu0 0
    %94 = vperm.xlu0 %93, %v87
    %v95 = vpop.permute.xlu0 %94
    %vm96 = vcmp.eq.s32.totalorder %v89, %v92
    %vm97 = vcmp.eq.s32.totalorder %v89, %v95
    %v98 = vsel %vm96, 1, 0
    %v99 = vsel %vm97, 1, 0
    %v100 = vcvt.s32.f32 %v98
    %v101 = vcvt.s32.f32 %v99
    %v102 = vld [vmem:[%s2] sm:$0xff]
    %v103 = vld [vmem:[%s2 + $0x8] sm:$0xff]
    %v104 = vld [vmem:[%s2 + $0x10] sm:$0xff]
    %v105 = vld [vmem:[%s2 + $0x18] sm:$0xff]
    %v106 = vld [vmem:[%s2 + $0x20] sm:$0xff]
    %v107 = vld [vmem:[%s2 + $0x28] sm:$0xff]
    %v108 = vld [vmem:[%s2 + $0x30] sm:$0xff]
    %v109 = vld [vmem:[%s2 + $0x38] sm:$0xff]
    %vm110 = vcmask 523264
    %v112 = vsel %vm110, %v100, 0
    %v115 = vsel %vm110, %v101, 0
    %117 = vmatprep.subr.mxu0 0.0
    %118 = vmatpush1.msra.mxu0 0.0
    %119 = vmatprep.subr.mxu0 0.0
    %120 = vmatpush1.msra.mxu0 0.0
    %121 = vmatprep.subr.mxu0 0.0
    %122 = vmatpush1.msra.mxu0 0.0
    %123 = vmatprep.subr.mxu0 0.0
    %124 = vmatpush1.msra.mxu0 0.0
    %125 = vmatprep.subr.mxu0 0.0
    %126 = vmatpush1.msra.mxu0 0.0
    %127 = vmatprep.subr.mxu0 0.0
    %128 = vmatpush1.msra.mxu0 0.0
    %129 = vmatprep.subr.mxu0 0.0
    %130 = vmatpush1.msra.mxu0 0.0
    %131 = vmatprep.subr.mxu0 0.0
    %132 = vmatpush1.msra.mxu0 0.0
    %133 = vmatprep.subr.mxu0 0.0
    %134 = vmatpush1.msra.mxu0 %v109
    %135 = vmatprep.subr.mxu0 0.0
    %136 = vmatpush1.msra.mxu0 %v108
    %137 = vmatprep.subr.mxu0 0.0
    %138 = vmatpush1.msra.mxu0 %v107
    %139 = vmatprep.subr.mxu0 0.0
    %140 = vmatpush1.msra.mxu0 %v106
    %141 = vmatprep.subr.mxu0 0.0
    %142 = vmatpush1.msra.mxu0 %v105
    %143 = vmatprep.subr.mxu0 0.0
    %144 = vmatpush1.msra.mxu0 %v104
    %145 = vmatprep.subr.mxu0 0.0
    %146 = vmatpush1.msra.mxu0 %v103
    %147 = vmatprep.subr.mxu0 0.0
    %148 = vmatpush1.msra.mxu0 %v102
    %149 = vmatprep.subr.mxu0 0.0
    %150 = vmatpush2.msra.mxu0 0.0
    %151 = vmatprep.subr.mxu0 0.0
    %152 = vmatpush2.msra.mxu0 0.0
    %153 = vmatprep.subr.mxu0 0.0
    %154 = vmatpush2.msra.mxu0 0.0
    %155 = vmatprep.subr.mxu0 0.0
    %156 = vmatpush2.msra.mxu0 0.0
    %157 = vmatprep.subr.mxu0 0.0
    %158 = vmatpush2.msra.mxu0 0.0
    %159 = vmatprep.subr.mxu0 0.0
    %160 = vmatpush2.msra.mxu0 0.0
    %161 = vmatprep.subr.mxu0 0.0
    %162 = vmatpush2.msra.mxu0 0.0
    %163 = vmatprep.subr.mxu0 0.0
    %164 = vmatpush2.msra.mxu0 0.0
    %165 = vmatprep.subr.mxu0 0.0
    %166 = vmatpush2.msra.mxu0 0.0
    %167 = vmatprep.subr.mxu0 0.0
    %168 = vmatpush2.msra.mxu0 0.0
    %169 = vmatprep.subr.mxu0 0.0
    %170 = vmatpush2.msra.mxu0 0.0
    %171 = vmatprep.subr.mxu0 0.0
    %172 = vmatpush2.msra.mxu0 0.0
    %173 = vmatprep.subr.mxu0 0.0
    %174 = vmatpush2.msra.mxu0 0.0
    %175 = vmatprep.subr.mxu0 0.0
    %176 = vmatpush2.msra.mxu0 0.0
    %177 = vmatprep.subr.mxu0 0.0
    %178 = vmatpush2.msra.mxu0 0.0
    %179 = vmatprep.subr.mxu0 0.0
    %180 = vmatpush2.msra.mxu0 0.0
    %181 = vmatprep.mubr.f32.mxu0 0.0
    %182 = vmatmul.mubr.f32.gmra.mxu0 %v112
    %v183 = vpop.f32.mrf.mxu0
    %v184 = vadd.f32 0.0, %v183
    %v185 = vpop.f32.mrf.mxu0
    %186 = vmatprep.mubr.f32.mxu0 0.0
    %187 = vmatmul.mubr.f32.gmra.mxu0 %v115
    %v188 = vpop.f32.mrf.mxu0
    %v189 = vadd.f32 0.0, %v188
    %v190 = vpop.f32.mrf.mxu0
    %191 = vdwg.mxu0
    %v192 = vld [vmem:[%s3] sm:$0xff]
    %v193 = vadd.f32 %v184, %v192
    %v194 = vadd.f32 %v189, %v192
    %v195 = vld [vmem:[%s4] sm:$0x1]
    %v197 = vlaneseq
    %v198 = vshrl.u32 %v197, 7
    %v199 = vsub.s32 0, %v198
    %v200 = vrot.slane %v195, %v199
    %v202 = vadd.f32 %v193, %v200
    %v203 = vadd.f32 %v194, %v200
    %v204 = vld [vmem:[%s5] sm:$0x1]
    %v205 = vld [vmem:[%s6] sm:$0x1]
    %vm206 = vcmask 261120
    %v207 = vsel %vm206, %v202, 0.0
    %208 = vadd.xlane.f32.xlu0 %v207
    %v209 = vpop.xlane.xlu0 %208
    %v210 = vsel %vm206, %v203, 0.0
    %211 = vadd.xlane.f32.xlu0 %v210
    %v212 = vpop.xlane.xlu0 %211
    %v213 = vrcp.pop 32.0
    %v214 = vmul.f32 %v209, %v213
    %v215 = vmul.f32 %v212, %v213
    %v216 = vsub.f32 %v202, %v214
    %v217 = vsub.f32 %v203, %v215
    %v218 = vmul.f32 %v216, %v216
    %v219 = vmul.f32 %v217, %v217
    %v220 = vsel %vm206, %v218, 0.0
    %221 = vadd.xlane.f32.xlu0 %v220
    %v222 = vpop.xlane.xlu0 %221
    %v223 = vsel %vm206, %v219, 0.0
    %224 = vadd.xlane.f32.xlu0 %v223
    %v225 = vpop.xlane.xlu0 %224
    %v226 = vmul.f32 %v222, %v213
    %v227 = vmul.f32 %v225, %v213
    %v228 = vadd.f32 %v226, 1e-12
    %v229 = vadd.f32 %v227, 1e-12
    %v230 = vrsqrt.pop %v228
    %v231 = vrsqrt.pop %v229
    %v232 = vmul.f32 %v216, %v230
    %v233 = vmul.f32 %v217, %v231
    %v235 = vlaneseq
    %v236 = vshrl.u32 %v235, 7
    %v237 = vsub.s32 0, %v236
    %v238 = vrot.slane %v204, %v237
    %v240 = vmul.f32 %v232, %v238
    %v241 = vmul.f32 %v233, %v238
    %v243 = vlaneseq
    %v244 = vshrl.u32 %v243, 7
    %v245 = vsub.s32 0, %v244
    %v246 = vrot.slane %v205, %v245
    %v248 = vadd.f32 %v240, %v246
    %v249 = vadd.f32 %v241, %v246
    %v250 = vld [vmem:[%s1] sm:$0x3]
    %v251 = vsub.f32 1.0, %v250
    %v252 = vmul.f32 %v251, -1e+09
    %v255 = vunpack.c.l.s4 1966171168
    %v256 = vunpack.c.0.s8 %v255
    %v257 = vlaneseq
    %v258 = vshrl.u32 %v257, 7
    %v259 = vsub.s32 %v256, %v258
    %v260 = vrot.slane %v252, %v259
    %v261 = vcombine.high %v260, %v260
    %v263 = vunpack.c.l.s4 1966171168
    %v264 = vunpack.c.0.s8 %v263
    %v265 = vlaneseq
    %v266 = vshrl.u32 %v265, 7
    %v267 = vsub.s32 %v264, %v266
    %v268 = vrot.slane %v260, %v267
    %v270 = vunpack.c.l.s4 1966171168
    %v271 = vunpack.c.0.s8 %v270
    %v272 = vlaneseq
    %v273 = vshrl.u32 %v272, 7
    %v274 = vsub.s32 %v271, %v273
    %v275 = vrot.slane %v261, %v274
    %vm276 = vcmp.ge.s32.totalorder %v89, 0
    %vm277 = vcmp.lt.s32.totalorder %v89, 16
    %vm278 = vmand %vm276, %vm277
    %v279 = vsel %vm278, 1, 0
    %v280 = vcvt.s32.f32 %v279
    %vm281 = vcmp.ge.s32.totalorder %v89, 16
    %vm282 = vcmp.lt.s32.totalorder %v89, 32
    %vm283 = vmand %vm281, %vm282
    %v284 = vsel %vm283, 1, 0
    %v285 = vcvt.s32.f32 %v284
    %v286 = vpack.c.bf16 %v249, %v248
    %v287 = vld [vmem:[%s7] sm:$0xf]
    %v288 = vld [vmem:[%s7 + $0x4] sm:$0xf]
    %v289 = vld [vmem:[%s7 + $0x8] sm:$0xf]
    %v290 = vld [vmem:[%s7 + $0xc] sm:$0xf]
    %v291 = vld [vmem:[%s8] sm:$0x1]
    %v293 = vlaneseq
    %v294 = vshrl.u32 %v293, 7
    %v295 = vsub.s32 0, %v294
    %v296 = vrot.slane %v291, %v295
    %v302 = vunpack.c.l.b16 %v287
    %v303 = vunpack.c.l.b16 %v288
    %v304 = vunpack.c.l.b16 %v289
    %v305 = vunpack.c.l.b16 %v290
    %v306 = vpack.c.b16 %v303, %v302
    %v307 = vpack.c.b16 %v305, %v304
    %v311 = vsel %vm206, %v286, 0
    %313 = vmatprep.subr.bf16.mxu0 0
    %314 = vmatpush1.bf16.msra.mxu0 0
    %315 = vmatprep.subr.bf16.mxu0 0
    %316 = vmatpush1.bf16.msra.mxu0 0
    %317 = vmatprep.subr.bf16.mxu0 0
    %318 = vmatpush1.bf16.msra.mxu0 0
    %319 = vmatprep.subr.bf16.mxu0 0
    %320 = vmatpush1.bf16.msra.mxu0 0
    %321 = vmatprep.subr.bf16.mxu0 0
    %322 = vmatpush1.bf16.msra.mxu0 0
    %323 = vmatprep.subr.bf16.mxu0 0
    %324 = vmatpush1.bf16.msra.mxu0 0
    %325 = vmatprep.subr.bf16.mxu0 0
    %326 = vmatpush1.bf16.msra.mxu0 %v307
    %327 = vmatprep.subr.bf16.mxu0 0
    %328 = vmatpush1.bf16.msra.mxu0 %v306
    %329 = vmatprep.subr.bf16.mxu0 0
    %330 = vmatpush2.bf16.msra.mxu0 0
    %331 = vmatprep.subr.bf16.mxu0 0
    %332 = vmatpush2.bf16.msra.mxu0 0
    %333 = vmatprep.subr.bf16.mxu0 0
    %334 = vmatpush2.bf16.msra.mxu0 0
    %335 = vmatprep.subr.bf16.mxu0 0
    %336 = vmatpush2.bf16.msra.mxu0 0
    %337 = vmatprep.subr.bf16.mxu0 0
    %338 = vmatpush2.bf16.msra.mxu0 0
    %339 = vmatprep.subr.bf16.mxu0 0
    %340 = vmatpush2.bf16.msra.mxu0 0
    %341 = vmatprep.subr.bf16.mxu0 0
    %342 = vmatpush2.bf16.msra.mxu0 0
    %343 = vmatprep.subr.bf16.mxu0 0
    %344 = vmatpush2.bf16.msra.mxu0 0
    %345 = vmatprep.mubr.bf16.mxu0 0
    %346 = vmatmul.mubr.bf16.gmra.mxu0 %v311
    %v347 = vpop.f32.mrf.mxu0
    %v348 = vadd.f32 %v296, %v347
    %v349 = vpop.f32.mrf.mxu0
    %v350 = vpop.f32.mrf.mxu0
    %v351 = vadd.f32 %v296, %v350
    %v352 = vpop.f32.mrf.mxu0
    %353 = vdwg.mxu0
    %355 = vrot.lane.b32.xlu0 %v280, 32
    %v356 = vpop.permute.xlu0 %355
    %v358 = vmul.f32 %v348, %v356
    %v359 = vmul.f32 %v351, %v356
    %361 = vrot.lane.b32.xlu0 %v285, 32
    %v362 = vpop.permute.xlu0 %361
    %v364 = vmul.f32 %v348, %v362
    %v365 = vmul.f32 %v351, %v362
    %366 = vrot.lane.b32.xlu0 %v280, 64
    %v367 = vpop.permute.xlu0 %366
    %v369 = vmul.f32 %v348, %v367
    %v370 = vmul.f32 %v351, %v367
    %371 = vrot.lane.b32.xlu0 %v285, 64
    %v372 = vpop.permute.xlu0 %371
    %v374 = vmul.f32 %v348, %v372
    %v375 = vmul.f32 %v351, %v372
    %v376 = vpack.c.bf16 %v348, %v348
    %v377 = vpack.c.bf16 %v351, %v351
    %v378 = vpack.c.bf16 %v358, %v358
    %v379 = vpack.c.bf16 %v359, %v359
    %v380 = vpack.c.bf16 %v364, %v364
    %v381 = vpack.c.bf16 %v365, %v365
    %383 = vrot.lane.b32.xlu0 %v378, 96
    %v384 = vpop.permute.xlu0 %383
    %v386 = vsel %vm206, %v376, 0
    %v389 = vsel %vm206, %v384, 0
    %391 = vmatprep.subr.bf16.mxu0 0
    %392 = vmatpush1.bf16.xpose.msra.mxu0 0
    %393 = vmatprep.subr.bf16.mxu0 0
    %394 = vmatpush1.bf16.xpose.msra.mxu0 0
    %395 = vmatprep.subr.bf16.mxu0 0
    %396 = vmatpush1.bf16.xpose.msra.mxu0 0
    %397 = vmatprep.subr.bf16.mxu0 0
    %398 = vmatpush1.bf16.xpose.msra.mxu0 0
    %399 = vmatprep.subr.bf16.mxu0 0
    %400 = vmatpush1.bf16.xpose.msra.mxu0 0
    %401 = vmatprep.subr.bf16.mxu0 0
    %402 = vmatpush1.bf16.xpose.msra.mxu0 0
    %403 = vmatprep.subr.bf16.mxu0 0
    %404 = vmatpush1.bf16.xpose.msra.mxu0 0
    %405 = vmatprep.subr.bf16.mxu0 0
    %406 = vmatpush1.bf16.xpose.msra.mxu0 %v389
    %407 = vmatprep.subr.bf16.mxu0 0
    %408 = vmatpush2.bf16.xpose.msra.mxu0 0
    %409 = vmatprep.subr.bf16.mxu0 0
    %410 = vmatpush2.bf16.xpose.msra.mxu0 0
    %411 = vmatprep.subr.bf16.mxu0 0
    %412 = vmatpush2.bf16.xpose.msra.mxu0 0
    %413 = vmatprep.subr.bf16.mxu0 0
    %414 = vmatpush2.bf16.xpose.msra.mxu0 0
    %415 = vmatprep.subr.bf16.mxu0 0
    %416 = vmatpush2.bf16.xpose.msra.mxu0 0
    %417 = vmatprep.subr.bf16.mxu0 0
    %418 = vmatpush2.bf16.xpose.msra.mxu0 0
    %419 = vmatprep.subr.bf16.mxu0 0
    %420 = vmatpush2.bf16.xpose.msra.mxu0 0
    %421 = vmatprep.subr.bf16.mxu0 0
    %422 = vmatpush2.bf16.xpose.msra.mxu0 0
    %423 = vmatprep.mubr.bf16.mxu0 0
    %424 = vmatmul.mubr.bf16.gmra.mxu0 %v386
    %v425 = vpop.f32.mrf.mxu0
    %v426 = vadd.f32 0.0, %v425
    %v427 = vpop.f32.mrf.mxu0
    %v428 = vpop.f32.mrf.mxu0
    %v429 = vpop.f32.mrf.mxu0
    %430 = vdwg.mxu0
    %432 = vrot.lane.b32.xlu0 %v379, 96
    %v433 = vpop.permute.xlu0 %432
    %v435 = vsel %vm206, %v377, 0
    %v438 = vsel %vm206, %v433, 0
    %440 = vmatprep.subr.bf16.mxu0 0
    %441 = vmatpush1.bf16.xpose.msra.mxu0 0
    %442 = vmatprep.subr.bf16.mxu0 0
    %443 = vmatpush1.bf16.xpose.msra.mxu0 0
    %444 = vmatprep.subr.bf16.mxu0 0
    %445 = vmatpush1.bf16.xpose.msra.mxu0 0
    %446 = vmatprep.subr.bf16.mxu0 0
    %447 = vmatpush1.bf16.xpose.msra.mxu0 0
    %448 = vmatprep.subr.bf16.mxu0 0
    %449 = vmatpush1.bf16.xpose.msra.mxu0 0
    %450 = vmatprep.subr.bf16.mxu0 0
    %451 = vmatpush1.bf16.xpose.msra.mxu0 0
    %452 = vmatprep.subr.bf16.mxu0 0
    %453 = vmatpush1.bf16.xpose.msra.mxu0 0
    %454 = vmatprep.subr.bf16.mxu0 0
    %455 = vmatpush1.bf16.xpose.msra.mxu0 %v438
    %456 = vmatprep.subr.bf16.mxu0 0
    %457 = vmatpush2.bf16.xpose.msra.mxu0 0
    %458 = vmatprep.subr.bf16.mxu0 0
    %459 = vmatpush2.bf16.xpose.msra.mxu0 0
    %460 = vmatprep.subr.bf16.mxu0 0
    %461 = vmatpush2.bf16.xpose.msra.mxu0 0
    %462 = vmatprep.subr.bf16.mxu0 0
    %463 = vmatpush2.bf16.xpose.msra.mxu0 0
    %464 = vmatprep.subr.bf16.mxu0 0
    %465 = vmatpush2.bf16.xpose.msra.mxu0 0
    %466 = vmatprep.subr.bf16.mxu0 0
    %467 = vmatpush2.bf16.xpose.msra.mxu0 0
    %468 = vmatprep.subr.bf16.mxu0 0
    %469 = vmatpush2.bf16.xpose.msra.mxu0 0
    %470 = vmatprep.subr.bf16.mxu0 0
    %471 = vmatpush2.bf16.xpose.msra.mxu0 0
    %472 = vmatprep.mubr.bf16.mxu0 0
    %473 = vmatmul.mubr.bf16.gmra.mxu0 %v435
    %v474 = vpop.f32.mrf.mxu0
    %v475 = vadd.f32 0.0, %v474
    %v476 = vpop.f32.mrf.mxu0
    %v477 = vpop.f32.mrf.mxu0
    %v478 = vpop.f32.mrf.mxu0
    %479 = vdwg.mxu0
    %481 = vrot.lane.b32.xlu0 %v380, 96
    %v482 = vpop.permute.xlu0 %481
    %v484 = vsel %vm206, %v482, 0
    %486 = vmatprep.subr.bf16.mxu0 0
    %487 = vmatpush1.bf16.xpose.msra.mxu0 0
    %488 = vmatprep.subr.bf16.mxu0 0
    %489 = vmatpush1.bf16.xpose.msra.mxu0 0
    %490 = vmatprep.subr.bf16.mxu0 0
    %491 = vmatpush1.bf16.xpose.msra.mxu0 0
    %492 = vmatprep.subr.bf16.mxu0 0
    %493 = vmatpush1.bf16.xpose.msra.mxu0 0
    %494 = vmatprep.subr.bf16.mxu0 0
    %495 = vmatpush1.bf16.xpose.msra.mxu0 0
    %496 = vmatprep.subr.bf16.mxu0 0
    %497 = vmatpush1.bf16.xpose.msra.mxu0 0
    %498 = vmatprep.subr.bf16.mxu0 0
    %499 = vmatpush1.bf16.xpose.msra.mxu0 0
    %500 = vmatprep.subr.bf16.mxu0 0
    %501 = vmatpush1.bf16.xpose.msra.mxu0 %v484
    %502 = vmatprep.subr.bf16.mxu0 0
    %503 = vmatpush2.bf16.xpose.msra.mxu0 0
    %504 = vmatprep.subr.bf16.mxu0 0
    %505 = vmatpush2.bf16.xpose.msra.mxu0 0
    %506 = vmatprep.subr.bf16.mxu0 0
    %507 = vmatpush2.bf16.xpose.msra.mxu0 0
    %508 = vmatprep.subr.bf16.mxu0 0
    %509 = vmatpush2.bf16.xpose.msra.mxu0 0
    %510 = vmatprep.subr.bf16.mxu0 0
    %511 = vmatpush2.bf16.xpose.msra.mxu0 0
    %512 = vmatprep.subr.bf16.mxu0 0
    %513 = vmatpush2.bf16.xpose.msra.mxu0 0
    %514 = vmatprep.subr.bf16.mxu0 0
    %515 = vmatpush2.bf16.xpose.msra.mxu0 0
    %516 = vmatprep.subr.bf16.mxu0 0
    %517 = vmatpush2.bf16.xpose.msra.mxu0 0
    %518 = vmatprep.mubr.bf16.mxu0 0
    %519 = vmatmul.mubr.bf16.gmra.mxu0 %v386
    %v520 = vpop.f32.mrf.mxu0
    %v521 = vadd.f32 0.0, %v520
    %v522 = vpop.f32.mrf.mxu0
    %v523 = vpop.f32.mrf.mxu0
    %v524 = vpop.f32.mrf.mxu0
    %525 = vdwg.mxu0
    %527 = vrot.lane.b32.xlu0 %v381, 96
    %v528 = vpop.permute.xlu0 %527
    %v530 = vsel %vm206, %v528, 0
    %532 = vmatprep.subr.bf16.mxu0 0
    %533 = vmatpush1.bf16.xpose.msra.mxu0 0
    %534 = vmatprep.subr.bf16.mxu0 0
    %535 = vmatpush1.bf16.xpose.msra.mxu0 0
    %536 = vmatprep.subr.bf16.mxu0 0
    %537 = vmatpush1.bf16.xpose.msra.mxu0 0
    %538 = vmatprep.subr.bf16.mxu0 0
    %539 = vmatpush1.bf16.xpose.msra.mxu0 0
    %540 = vmatprep.subr.bf16.mxu0 0
    %541 = vmatpush1.bf16.xpose.msra.mxu0 0
    %542 = vmatprep.subr.bf16.mxu0 0
    %543 = vmatpush1.bf16.xpose.msra.mxu0 0
    %544 = vmatprep.subr.bf16.mxu0 0
    %545 = vmatpush1.bf16.xpose.msra.mxu0 0
    %546 = vmatprep.subr.bf16.mxu0 0
    %547 = vmatpush1.bf16.xpose.msra.mxu0 %v530
    %548 = vmatprep.subr.bf16.mxu0 0
    %549 = vmatpush2.bf16.xpose.msra.mxu0 0
    %550 = vmatprep.subr.bf16.mxu0 0
    %551 = vmatpush2.bf16.xpose.msra.mxu0 0
    %552 = vmatprep.subr.bf16.mxu0 0
    %553 = vmatpush2.bf16.xpose.msra.mxu0 0
    %554 = vmatprep.subr.bf16.mxu0 0
    %555 = vmatpush2.bf16.xpose.msra.mxu0 0
    %556 = vmatprep.subr.bf16.mxu0 0
    %557 = vmatpush2.bf16.xpose.msra.mxu0 0
    %558 = vmatprep.subr.bf16.mxu0 0
    %559 = vmatpush2.bf16.xpose.msra.mxu0 0
    %560 = vmatprep.subr.bf16.mxu0 0
    %561 = vmatpush2.bf16.xpose.msra.mxu0 0
    %562 = vmatprep.subr.bf16.mxu0 0
    %563 = vmatpush2.bf16.xpose.msra.mxu0 0
    %564 = vmatprep.mubr.bf16.mxu0 0
    %565 = vmatmul.mubr.bf16.gmra.mxu0 %v435
    %v566 = vpop.f32.mrf.mxu0
    %v567 = vadd.f32 0.0, %v566
    %v568 = vpop.f32.mrf.mxu0
    %v569 = vpop.f32.mrf.mxu0
    %v570 = vpop.f32.mrf.mxu0
    %571 = vdwg.mxu0
    %v572 = vmul.f32 %v426, 0.25
    %v573 = vmul.f32 %v475, 0.25
    %v574 = vmul.f32 %v521, 0.25
    %v575 = vmul.f32 %v567, 0.25
    %v576 = vlaneseq
    %v577 = vshrl.u32 %v576, 7
    %v578 = vsub.s32 0, %v577
    %v579 = vrot.slane %v268, %v578
    %v580 = vlaneseq
    %v581 = vshrl.u32 %v580, 7
    %v582 = vsub.s32 0, %v581
    %v583 = vrot.slane %v275, %v582
    %v586 = vadd.f32 %v572, %v579
    %v587 = vadd.f32 %v573, %v583
    %v588 = vadd.f32 %v574, %v579
    %v589 = vadd.f32 %v575, %v583
    %vm590 = vcmask 64512
    %v591 = vsel %vm590, %v586, -inf
    %592 = vmax.xlane.f32.xlu0 %v591
    %v593 = vpop.xlane.xlu0 %592
    %v594 = vsel %vm590, %v587, -inf
    %595 = vmax.xlane.f32.xlu0 %v594
    %v596 = vpop.xlane.xlu0 %595
    %v597 = vsel %vm590, %v588, -inf
    %598 = vmax.xlane.f32.xlu0 %v597
    %v599 = vpop.xlane.xlu0 %598
    %v600 = vsel %vm590, %v589, -inf
    %601 = vmax.xlane.f32.xlu0 %v600
    %v602 = vpop.xlane.xlu0 %601
    %v603 = vsub.f32 %v586, %v593
    %v604 = vsub.f32 %v587, %v596
    %v605 = vsub.f32 %v588, %v599
    %v606 = vsub.f32 %v589, %v602
    %v607 = vmul.f32 %v603, 1.442695
    %v608 = vpow.pop %v607
    %v609 = vmul.f32 %v604, 1.442695
    %v610 = vpow.pop %v609
    %v611 = vmul.f32 %v605, 1.442695
    %v612 = vpow.pop %v611
    %v613 = vmul.f32 %v606, 1.442695
    %v614 = vpow.pop %v613
    %v615 = vsel %vm590, %v608, 0.0
    %616 = vadd.xlane.f32.xlu0 %v615
    %v617 = vpop.xlane.xlu0 %616
    %v618 = vsel %vm590, %v610, 0.0
    %619 = vadd.xlane.f32.xlu0 %v618
    %v620 = vpop.xlane.xlu0 %619
    %v621 = vsel %vm590, %v612, 0.0
    %622 = vadd.xlane.f32.xlu0 %v621
    %v623 = vpop.xlane.xlu0 %622
    %v624 = vsel %vm590, %v614, 0.0
    %625 = vadd.xlane.f32.xlu0 %v624
    %v626 = vpop.xlane.xlu0 %625
    %v627 = vrcp.pop %v617
    %v628 = vrcp.pop %v620
    %v629 = vrcp.pop %v623
    %v630 = vrcp.pop %v626
    %v631 = vmul.f32 %v608, %v627
    %v632 = vmul.f32 %v610, %v628
    %v633 = vmul.f32 %v612, %v629
    %v634 = vmul.f32 %v614, %v630
    %v635 = vpack.c.bf16 %v631, %v631
    %v636 = vpack.c.bf16 %v632, %v632
    %v637 = vpack.c.bf16 %v633, %v633
    %v638 = vpack.c.bf16 %v634, %v634
    %v639 = vpack.c.bf16 %v369, %v369
    %v640 = vpack.c.bf16 %v370, %v370
    %v641 = vpack.c.bf16 %v374, %v374
    %v642 = vpack.c.bf16 %v375, %v375
    %644 = vrot.lane.b32.xlu0 %v639, 64
    %v645 = vpop.permute.xlu0 %644
    %v647 = vsel %vm590, %v635, 0
    %vm649 = vcmask 1043456
    %v651 = vsel %vm649, %v645, 0
    %653 = vmatprep.subr.bf16.mxu0 0
    %654 = vmatpush1.bf16.msra.mxu0 0
    %655 = vmatprep.subr.bf16.mxu0 0
    %656 = vmatpush1.bf16.msra.mxu0 0
    %657 = vmatprep.subr.bf16.mxu0 0
    %658 = vmatpush1.bf16.msra.mxu0 0
    %659 = vmatprep.subr.bf16.mxu0 0
    %660 = vmatpush1.bf16.msra.mxu0 0
    %661 = vmatprep.subr.bf16.mxu0 0
    %662 = vmatpush1.bf16.msra.mxu0 0
    %663 = vmatprep.subr.bf16.mxu0 0
    %664 = vmatpush1.bf16.msra.mxu0 0
    %665 = vmatprep.subr.bf16.mxu0 0
    %666 = vmatpush1.bf16.msra.mxu0 0
    %667 = vmatprep.subr.bf16.mxu0 0
    %668 = vmatpush1.bf16.msra.mxu0 %v651
    %669 = vmatprep.subr.bf16.mxu0 0
    %670 = vmatpush2.bf16.msra.mxu0 0
    %671 = vmatprep.subr.bf16.mxu0 0
    %672 = vmatpush2.bf16.msra.mxu0 0
    %673 = vmatprep.subr.bf16.mxu0 0
    %674 = vmatpush2.bf16.msra.mxu0 0
    %675 = vmatprep.subr.bf16.mxu0 0
    %676 = vmatpush2.bf16.msra.mxu0 0
    %677 = vmatprep.subr.bf16.mxu0 0
    %678 = vmatpush2.bf16.msra.mxu0 0
    %679 = vmatprep.subr.bf16.mxu0 0
    %680 = vmatpush2.bf16.msra.mxu0 0
    %681 = vmatprep.subr.bf16.mxu0 0
    %682 = vmatpush2.bf16.msra.mxu0 0
    %683 = vmatprep.subr.bf16.mxu0 0
    %684 = vmatpush2.bf16.msra.mxu0 0
    %685 = vmatprep.mubr.bf16.mxu0 0
    %686 = vmatmul.mubr.bf16.gmra.mxu0 %v647
    %v687 = vpop.f32.mrf.mxu0
    %v688 = vadd.f32 0.0, %v687
    %v689 = vpop.f32.mrf.mxu0
    %v690 = vpop.f32.mrf.mxu0
    %v691 = vpop.f32.mrf.mxu0
    %692 = vdwg.mxu0
    %694 = vrot.lane.b32.xlu0 %v640, 64
    %v695 = vpop.permute.xlu0 %694
    %v697 = vsel %vm590, %v636, 0
    %v700 = vsel %vm649, %v695, 0
    %702 = vmatprep.subr.bf16.mxu0 0
    %703 = vmatpush1.bf16.msra.mxu0 0
    %704 = vmatprep.subr.bf16.mxu0 0
    %705 = vmatpush1.bf16.msra.mxu0 0
    %706 = vmatprep.subr.bf16.mxu0 0
    %707 = vmatpush1.bf16.msra.mxu0 0
    %708 = vmatprep.subr.bf16.mxu0 0
    %709 = vmatpush1.bf16.msra.mxu0 0
    %710 = vmatprep.subr.bf16.mxu0 0
    %711 = vmatpush1.bf16.msra.mxu0 0
    %712 = vmatprep.subr.bf16.mxu0 0
    %713 = vmatpush1.bf16.msra.mxu0 0
    %714 = vmatprep.subr.bf16.mxu0 0
    %715 = vmatpush1.bf16.msra.mxu0 0
    %716 = vmatprep.subr.bf16.mxu0 0
    %717 = vmatpush1.bf16.msra.mxu0 %v700
    %718 = vmatprep.subr.bf16.mxu0 0
    %719 = vmatpush2.bf16.msra.mxu0 0
    %720 = vmatprep.subr.bf16.mxu0 0
    %721 = vmatpush2.bf16.msra.mxu0 0
    %722 = vmatprep.subr.bf16.mxu0 0
    %723 = vmatpush2.bf16.msra.mxu0 0
    %724 = vmatprep.subr.bf16.mxu0 0
    %725 = vmatpush2.bf16.msra.mxu0 0
    %726 = vmatprep.subr.bf16.mxu0 0
    %727 = vmatpush2.bf16.msra.mxu0 0
    %728 = vmatprep.subr.bf16.mxu0 0
    %729 = vmatpush2.bf16.msra.mxu0 0
    %730 = vmatprep.subr.bf16.mxu0 0
    %731 = vmatpush2.bf16.msra.mxu0 0
    %732 = vmatprep.subr.bf16.mxu0 0
    %733 = vmatpush2.bf16.msra.mxu0 0
    %734 = vmatprep.mubr.bf16.mxu0 0
    %735 = vmatmul.mubr.bf16.gmra.mxu0 %v697
    %v736 = vpop.f32.mrf.mxu0
    %v737 = vadd.f32 0.0, %v736
    %v738 = vpop.f32.mrf.mxu0
    %v739 = vpop.f32.mrf.mxu0
    %v740 = vpop.f32.mrf.mxu0
    %741 = vdwg.mxu0
    %743 = vrot.lane.b32.xlu0 %v641, 64
    %v744 = vpop.permute.xlu0 %743
    %v746 = vsel %vm590, %v637, 0
    %v749 = vsel %vm649, %v744, 0
    %751 = vmatprep.subr.bf16.mxu0 0
    %752 = vmatpush1.bf16.msra.mxu0 0
    %753 = vmatprep.subr.bf16.mxu0 0
    %754 = vmatpush1.bf16.msra.mxu0 0
    %755 = vmatprep.subr.bf16.mxu0 0
    %756 = vmatpush1.bf16.msra.mxu0 0
    %757 = vmatprep.subr.bf16.mxu0 0
    %758 = vmatpush1.bf16.msra.mxu0 0
    %759 = vmatprep.subr.bf16.mxu0 0
    %760 = vmatpush1.bf16.msra.mxu0 0
    %761 = vmatprep.subr.bf16.mxu0 0
    %762 = vmatpush1.bf16.msra.mxu0 0
    %763 = vmatprep.subr.bf16.mxu0 0
    %764 = vmatpush1.bf16.msra.mxu0 0
    %765 = vmatprep.subr.bf16.mxu0 0
    %766 = vmatpush1.bf16.msra.mxu0 %v749
    %767 = vmatprep.subr.bf16.mxu0 0
    %768 = vmatpush2.bf16.msra.mxu0 0
    %769 = vmatprep.subr.bf16.mxu0 0
    %770 = vmatpush2.bf16.msra.mxu0 0
    %771 = vmatprep.subr.bf16.mxu0 0
    %772 = vmatpush2.bf16.msra.mxu0 0
    %773 = vmatprep.subr.bf16.mxu0 0
    %774 = vmatpush2.bf16.msra.mxu0 0
    %775 = vmatprep.subr.bf16.mxu0 0
    %776 = vmatpush2.bf16.msra.mxu0 0
    %777 = vmatprep.subr.bf16.mxu0 0
    %778 = vmatpush2.bf16.msra.mxu0 0
    %779 = vmatprep.subr.bf16.mxu0 0
    %780 = vmatpush2.bf16.msra.mxu0 0
    %781 = vmatprep.subr.bf16.mxu0 0
    %782 = vmatpush2.bf16.msra.mxu0 0
    %783 = vmatprep.mubr.bf16.mxu0 0
    %784 = vmatmul.mubr.bf16.gmra.mxu0 %v746
    %v785 = vpop.f32.mrf.mxu0
    %v786 = vadd.f32 0.0, %v785
    %v787 = vpop.f32.mrf.mxu0
    %v788 = vpop.f32.mrf.mxu0
    %v789 = vpop.f32.mrf.mxu0
    %790 = vdwg.mxu0
    %792 = vrot.lane.b32.xlu0 %v642, 64
    %v793 = vpop.permute.xlu0 %792
    %v795 = vsel %vm590, %v638, 0
    %v798 = vsel %vm649, %v793, 0
    %800 = vmatprep.subr.bf16.mxu0 0
    %801 = vmatpush1.bf16.msra.mxu0 0
    %802 = vmatprep.subr.bf16.mxu0 0
    %803 = vmatpush1.bf16.msra.mxu0 0
    %804 = vmatprep.subr.bf16.mxu0 0
    %805 = vmatpush1.bf16.msra.mxu0 0
    %806 = vmatprep.subr.bf16.mxu0 0
    %807 = vmatpush1.bf16.msra.mxu0 0
    %808 = vmatprep.subr.bf16.mxu0 0
    %809 = vmatpush1.bf16.msra.mxu0 0
    %810 = vmatprep.subr.bf16.mxu0 0
    %811 = vmatpush1.bf16.msra.mxu0 0
    %812 = vmatprep.subr.bf16.mxu0 0
    %813 = vmatpush1.bf16.msra.mxu0 0
    %814 = vmatprep.subr.bf16.mxu0 0
    %815 = vmatpush1.bf16.msra.mxu0 %v798
    %816 = vmatprep.subr.bf16.mxu0 0
    %817 = vmatpush2.bf16.msra.mxu0 0
    %818 = vmatprep.subr.bf16.mxu0 0
    %819 = vmatpush2.bf16.msra.mxu0 0
    %820 = vmatprep.subr.bf16.mxu0 0
    %821 = vmatpush2.bf16.msra.mxu0 0
    %822 = vmatprep.subr.bf16.mxu0 0
    %823 = vmatpush2.bf16.msra.mxu0 0
    %824 = vmatprep.subr.bf16.mxu0 0
    %825 = vmatpush2.bf16.msra.mxu0 0
    %826 = vmatprep.subr.bf16.mxu0 0
    %827 = vmatpush2.bf16.msra.mxu0 0
    %828 = vmatprep.subr.bf16.mxu0 0
    %829 = vmatpush2.bf16.msra.mxu0 0
    %830 = vmatprep.subr.bf16.mxu0 0
    %831 = vmatpush2.bf16.msra.mxu0 0
    %832 = vmatprep.mubr.bf16.mxu0 0
    %833 = vmatmul.mubr.bf16.gmra.mxu0 %v795
    %v834 = vpop.f32.mrf.mxu0
    %v835 = vadd.f32 0.0, %v834
    %v836 = vpop.f32.mrf.mxu0
    %v837 = vpop.f32.mrf.mxu0
    %v838 = vpop.f32.mrf.mxu0
    %839 = vdwg.mxu0
    %v840 = vadd.f32 %v688, %v786
    %v841 = vadd.f32 %v737, %v835
    %v842 = vpack.c.bf16 %v841, %v840
    %v843 = vld [vmem:[%s9] sm:$0xf]
    %v844 = vld [vmem:[%s9 + $0x4] sm:$0xf]
    %v845 = vld [vmem:[%s9 + $0x8] sm:$0xf]
    %v846 = vld [vmem:[%s9 + $0xc] sm:$0xf]
    %v847 = vld [vmem:[%s10] sm:$0x1]
    %v849 = vlaneseq
    %v850 = vshrl.u32 %v849, 7
    %v851 = vsub.s32 0, %v850
    %v852 = vrot.slane %v847, %v851
    %v858 = vunpack.c.l.b16 %v843
    %v859 = vunpack.c.l.b16 %v844
    %v860 = vunpack.c.l.b16 %v845
    %v861 = vunpack.c.l.b16 %v846
    %v862 = vpack.c.b16 %v859, %v858
    %v863 = vpack.c.b16 %v861, %v860
    %v867 = vsel %vm206, %v842, 0
    %869 = vmatprep.subr.bf16.mxu0 0
    %870 = vmatpush1.bf16.msra.mxu0 0
    %871 = vmatprep.subr.bf16.mxu0 0
    %872 = vmatpush1.bf16.msra.mxu0 0
    %873 = vmatprep.subr.bf16.mxu0 0
    %874 = vmatpush1.bf16.msra.mxu0 0
    %875 = vmatprep.subr.bf16.mxu0 0
    %876 = vmatpush1.bf16.msra.mxu0 0
    %877 = vmatprep.subr.bf16.mxu0 0
    %878 = vmatpush1.bf16.msra.mxu0 0
    %879 = vmatprep.subr.bf16.mxu0 0
    %880 = vmatpush1.bf16.msra.mxu0 0
    %881 = vmatprep.subr.bf16.mxu0 0
    %882 = vmatpush1.bf16.msra.mxu0 %v863
    %883 = vmatprep.subr.bf16.mxu0 0
    %884 = vmatpush1.bf16.msra.mxu0 %v862
    %885 = vmatprep.subr.bf16.mxu0 0
    %886 = vmatpush2.bf16.msra.mxu0 0
    %887 = vmatprep.subr.bf16.mxu0 0
    %888 = vmatpush2.bf16.msra.mxu0 0
    %889 = vmatprep.subr.bf16.mxu0 0
    %890 = vmatpush2.bf16.msra.mxu0 0
    %891 = vmatprep.subr.bf16.mxu0 0
    %892 = vmatpush2.bf16.msra.mxu0 0
    %893 = vmatprep.subr.bf16.mxu0 0
    %894 = vmatpush2.bf16.msra.mxu0 0
    %895 = vmatprep.subr.bf16.mxu0 0
    %896 = vmatpush2.bf16.msra.mxu0 0
    %897 = vmatprep.subr.bf16.mxu0 0
    %898 = vmatpush2.bf16.msra.mxu0 0
    %899 = vmatprep.subr.bf16.mxu0 0
    %900 = vmatpush2.bf16.msra.mxu0 0
    %901 = vmatprep.mubr.bf16.mxu0 0
    %902 = vmatmul.mubr.bf16.gmra.mxu0 %v867
    %v903 = vpop.f32.mrf.mxu0
    %v904 = vadd.f32 %v852, %v903
    %v905 = vpop.f32.mrf.mxu0
    %v906 = vpop.f32.mrf.mxu0
    %v907 = vadd.f32 %v852, %v906
    %v908 = vpop.f32.mrf.mxu0
    %909 = vdwg.mxu0
    %v910 = vadd.f32 %v248, %v904
    %v911 = vadd.f32 %v249, %v907
    %v912 = vld [vmem:[%s11] sm:$0x1]
    %v913 = vld [vmem:[%s12] sm:$0x1]
    %v914 = vsel %vm206, %v910, 0.0
    %915 = vadd.xlane.f32.xlu0 %v914
    %v916 = vpop.xlane.xlu0 %915
    %v917 = vsel %vm206, %v911, 0.0
    %918 = vadd.xlane.f32.xlu0 %v917
    %v919 = vpop.xlane.xlu0 %918
    %v920 = vmul.f32 %v916, %v213
    %v921 = vmul.f32 %v919, %v213
    %v922 = vsub.f32 %v910, %v920
    %v923 = vsub.f32 %v911, %v921
    %v924 = vmul.f32 %v922, %v922
    %v925 = vmul.f32 %v923, %v923
    %v926 = vsel %vm206, %v924, 0.0
    %927 = vadd.xlane.f32.xlu0 %v926
    %v928 = vpop.xlane.xlu0 %927
    %v929 = vsel %vm206, %v925, 0.0
    %930 = vadd.xlane.f32.xlu0 %v929
    %v931 = vpop.xlane.xlu0 %930
    %v932 = vmul.f32 %v928, %v213
    %v933 = vmul.f32 %v931, %v213
    %v934 = vadd.f32 %v932, 1e-12
    %v935 = vadd.f32 %v933, 1e-12
    %v936 = vrsqrt.pop %v934
    %v937 = vrsqrt.pop %v935
    %v938 = vmul.f32 %v922, %v936
    %v939 = vmul.f32 %v923, %v937
    %v941 = vlaneseq
    %v942 = vshrl.u32 %v941, 7
    %v943 = vsub.s32 0, %v942
    %v944 = vrot.slane %v912, %v943
    %v946 = vmul.f32 %v938, %v944
    %v947 = vmul.f32 %v939, %v944
    %v949 = vlaneseq
    %v950 = vshrl.u32 %v949, 7
    %v951 = vsub.s32 0, %v950
    %v952 = vrot.slane %v913, %v951
    %v954 = vadd.f32 %v946, %v952
    %v955 = vadd.f32 %v947, %v952
    %v956 = vpack.c.bf16 %v955, %v954
    %v957 = vld [vmem:[%s13] sm:$0xf]
    %v958 = vld [vmem:[%s13 + $0x4] sm:$0xf]
    %v959 = vld [vmem:[%s13 + $0x8] sm:$0xf]
    %v960 = vld [vmem:[%s13 + $0xc] sm:$0xf]
    %v961 = vld [vmem:[%s14] sm:$0x1]
    %v963 = vlaneseq
    %v964 = vshrl.u32 %v963, 7
    %v965 = vsub.s32 0, %v964
    %v966 = vrot.slane %v961, %v965
    %v972 = vunpack.c.l.b16 %v957
    %v973 = vunpack.c.l.b16 %v958
    %v974 = vunpack.c.l.b16 %v959
    %v975 = vunpack.c.l.b16 %v960
    %v976 = vpack.c.b16 %v973, %v972
    %v977 = vpack.c.b16 %v975, %v974
    %v981 = vsel %vm206, %v956, 0
    %983 = vmatprep.subr.bf16.mxu0 0
    %984 = vmatpush1.bf16.msra.mxu0 0
    %985 = vmatprep.subr.bf16.mxu0 0
    %986 = vmatpush1.bf16.msra.mxu0 0
    %987 = vmatprep.subr.bf16.mxu0 0
    %988 = vmatpush1.bf16.msra.mxu0 0
    %989 = vmatprep.subr.bf16.mxu0 0
    %990 = vmatpush1.bf16.msra.mxu0 0
    %991 = vmatprep.subr.bf16.mxu0 0
    %992 = vmatpush1.bf16.msra.mxu0 0
    %993 = vmatprep.subr.bf16.mxu0 0
    %994 = vmatpush1.bf16.msra.mxu0 0
    %995 = vmatprep.subr.bf16.mxu0 0
    %996 = vmatpush1.bf16.msra.mxu0 %v977
    %997 = vmatprep.subr.bf16.mxu0 0
    %998 = vmatpush1.bf16.msra.mxu0 %v976
    %999 = vmatprep.subr.bf16.mxu0 0
    %1000 = vmatpush2.bf16.msra.mxu0 0
    %1001 = vmatprep.subr.bf16.mxu0 0
    %1002 = vmatpush2.bf16.msra.mxu0 0
    %1003 = vmatprep.subr.bf16.mxu0 0
    %1004 = vmatpush2.bf16.msra.mxu0 0
    %1005 = vmatprep.subr.bf16.mxu0 0
    %1006 = vmatpush2.bf16.msra.mxu0 0
    %1007 = vmatprep.subr.bf16.mxu0 0
    %1008 = vmatpush2.bf16.msra.mxu0 0
    %1009 = vmatprep.subr.bf16.mxu0 0
    %1010 = vmatpush2.bf16.msra.mxu0 0
    %1011 = vmatprep.subr.bf16.mxu0 0
    %1012 = vmatpush2.bf16.msra.mxu0 0
    %1013 = vmatprep.subr.bf16.mxu0 0
    %1014 = vmatpush2.bf16.msra.mxu0 0
    %1015 = vmatprep.mubr.bf16.mxu0 0
    %1016 = vmatmul.mubr.bf16.gmra.mxu0 %v981
    %v1017 = vpop.f32.mrf.mxu0
    %v1018 = vadd.f32 %v966, %v1017
    %v1019 = vpop.f32.mrf.mxu0
    %v1020 = vpop.f32.mrf.mxu0
    %v1021 = vadd.f32 %v966, %v1020
    %v1022 = vpop.f32.mrf.mxu0
    %1023 = vdwg.mxu0
    %v1024 = vmul.f32 %v1018, %v1018
    %v1025 = vmul.f32 %v1021, %v1021
    %v1026 = vmul.f32 %v1018, %v1024
    %v1027 = vmul.f32 %v1021, %v1025
    %v1028 = vmul.f32 %v1026, 0.044715
    %v1029 = vmul.f32 %v1027, 0.044715
    %v1030 = vadd.f32 %v1018, %v1028
    %v1031 = vadd.f32 %v1021, %v1029
    %v1032 = vmul.f32 %v1030, 0.7978846
    %v1033 = vmul.f32 %v1031, 0.7978846
    %v1034 = vtanh.pop %v1032
    %v1035 = vtanh.pop %v1033
    %v1036 = vadd.f32 %v1034, 1.0
    %v1037 = vadd.f32 %v1035, 1.0
    %v1038 = vmul.f32 %v1036, 0.5
    %v1039 = vmul.f32 %v1037, 0.5
    %v1040 = vmul.f32 %v1018, %v1038
    %v1041 = vmul.f32 %v1021, %v1039
    %v1042 = vpack.c.bf16 %v1041, %v1040
    %v1043 = vld [vmem:[%s15] sm:$0xf]
    %v1044 = vld [vmem:[%s15 + $0x4] sm:$0xf]
    %v1045 = vld [vmem:[%s15 + $0x8] sm:$0xf]
    %v1046 = vld [vmem:[%s15 + $0xc] sm:$0xf]
    %v1047 = vld [vmem:[%s15 + $0x10] sm:$0xf]
    %v1048 = vld [vmem:[%s15 + $0x14] sm:$0xf]
    %v1049 = vld [vmem:[%s15 + $0x18] sm:$0xf]
    %v1050 = vld [vmem:[%s15 + $0x1c] sm:$0xf]
    %v1051 = vld [vmem:[%s15 + $0x20] sm:$0xf]
    %v1052 = vld [vmem:[%s15 + $0x24] sm:$0xf]
    %v1053 = vld [vmem:[%s15 + $0x28] sm:$0xf]
    %v1054 = vld [vmem:[%s15 + $0x2c] sm:$0xf]
    %v1055 = vld [vmem:[%s15 + $0x30] sm:$0xf]
    %v1056 = vld [vmem:[%s15 + $0x34] sm:$0xf]
    %v1057 = vld [vmem:[%s15 + $0x38] sm:$0xf]
    %v1058 = vld [vmem:[%s15 + $0x3c] sm:$0xf]
    %v1059 = vld [vmem:[%s16] sm:$0x1]
    %v1061 = vlaneseq
    %v1062 = vshrl.u32 %v1061, 7
    %v1063 = vsub.s32 0, %v1062
    %v1064 = vrot.slane %v1059, %v1063
    %v1082 = vunpack.c.l.b16 %v1043
    %v1083 = vunpack.c.l.b16 %v1044
    %v1084 = vunpack.c.l.b16 %v1045
    %v1085 = vunpack.c.l.b16 %v1046
    %v1086 = vunpack.c.l.b16 %v1047
    %v1087 = vunpack.c.l.b16 %v1048
    %v1088 = vunpack.c.l.b16 %v1049
    %v1089 = vunpack.c.l.b16 %v1050
    %v1090 = vunpack.c.l.b16 %v1051
    %v1091 = vunpack.c.l.b16 %v1052
    %v1092 = vunpack.c.l.b16 %v1053
    %v1093 = vunpack.c.l.b16 %v1054
    %v1094 = vunpack.c.l.b16 %v1055
    %v1095 = vunpack.c.l.b16 %v1056
    %v1096 = vunpack.c.l.b16 %v1057
    %v1097 = vunpack.c.l.b16 %v1058
    %v1098 = vpack.c.b16 %v1083, %v1082
    %v1099 = vpack.c.b16 %v1085, %v1084
    %v1100 = vpack.c.b16 %v1087, %v1086
    %v1101 = vpack.c.b16 %v1089, %v1088
    %v1102 = vpack.c.b16 %v1091, %v1090
    %v1103 = vpack.c.b16 %v1093, %v1092
    %v1104 = vpack.c.b16 %v1095, %v1094
    %v1105 = vpack.c.b16 %v1097, %v1096
    %1114 = vmatprep.subr.bf16.mxu0 0
    %1115 = vmatpush1.bf16.msra.mxu0 %v1105
    %1116 = vmatprep.subr.bf16.mxu0 0
    %1117 = vmatpush1.bf16.msra.mxu0 %v1104
    %1118 = vmatprep.subr.bf16.mxu0 0
    %1119 = vmatpush1.bf16.msra.mxu0 %v1103
    %1120 = vmatprep.subr.bf16.mxu0 0
    %1121 = vmatpush1.bf16.msra.mxu0 %v1102
    %1122 = vmatprep.subr.bf16.mxu0 0
    %1123 = vmatpush1.bf16.msra.mxu0 %v1101
    %1124 = vmatprep.subr.bf16.mxu0 0
    %1125 = vmatpush1.bf16.msra.mxu0 %v1100
    %1126 = vmatprep.subr.bf16.mxu0 0
    %1127 = vmatpush1.bf16.msra.mxu0 %v1099
    %1128 = vmatprep.subr.bf16.mxu0 0
    %1129 = vmatpush1.bf16.msra.mxu0 %v1098
    %1130 = vmatprep.subr.bf16.mxu0 0
    %1131 = vmatpush2.bf16.msra.mxu0 0
    %1132 = vmatprep.subr.bf16.mxu0 0
    %1133 = vmatpush2.bf16.msra.mxu0 0
    %1134 = vmatprep.subr.bf16.mxu0 0
    %1135 = vmatpush2.bf16.msra.mxu0 0
    %1136 = vmatprep.subr.bf16.mxu0 0
    %1137 = vmatpush2.bf16.msra.mxu0 0
    %1138 = vmatprep.subr.bf16.mxu0 0
    %1139 = vmatpush2.bf16.msra.mxu0 0
    %1140 = vmatprep.subr.bf16.mxu0 0
    %1141 = vmatpush2.bf16.msra.mxu0 0
    %1142 = vmatprep.subr.bf16.mxu0 0
    %1143 = vmatpush2.bf16.msra.mxu0 0
    %1144 = vmatprep.subr.bf16.mxu0 0
    %1145 = vmatpush2.bf16.msra.mxu0 0
    %1146 = vmatprep.mubr.bf16.mxu0 0
    %1147 = vmatmul.mubr.bf16.gmra.mxu0 %v1042
    %v1148 = vpop.f32.mrf.mxu0
    %v1149 = vadd.f32 %v1064, %v1148
    %v1150 = vpop.f32.mrf.mxu0
    %v1151 = vpop.f32.mrf.mxu0
    %v1152 = vadd.f32 %v1064, %v1151
    %v1153 = vpop.f32.mrf.mxu0
    %1154 = vdwg.mxu0
    %v1155 = vadd.f32 %v954, %v1149
    %v1156 = vadd.f32 %v955, %v1152
    %v1157 = vld [vmem:[%s17] sm:$0x1]
    %v1158 = vld [vmem:[%s18] sm:$0x1]
    %v1159 = vsel %vm206, %v1155, 0.0
    %1160 = vadd.xlane.f32.xlu0 %v1159
    %v1161 = vpop.xlane.xlu0 %1160
    %v1162 = vsel %vm206, %v1156, 0.0
    %1163 = vadd.xlane.f32.xlu0 %v1162
    %v1164 = vpop.xlane.xlu0 %1163
    %v1165 = vmul.f32 %v1161, %v213
    %v1166 = vmul.f32 %v1164, %v213
    %v1167 = vsub.f32 %v1155, %v1165
    %v1168 = vsub.f32 %v1156, %v1166
    %v1169 = vmul.f32 %v1167, %v1167
    %v1170 = vmul.f32 %v1168, %v1168
    %v1171 = vsel %vm206, %v1169, 0.0
    %1172 = vadd.xlane.f32.xlu0 %v1171
    %v1173 = vpop.xlane.xlu0 %1172
    %v1174 = vsel %vm206, %v1170, 0.0
    %1175 = vadd.xlane.f32.xlu0 %v1174
    %v1176 = vpop.xlane.xlu0 %1175
    %v1177 = vmul.f32 %v1173, %v213
    %v1178 = vmul.f32 %v1176, %v213
    %v1179 = vadd.f32 %v1177, 1e-12
    %v1180 = vadd.f32 %v1178, 1e-12
    %v1181 = vrsqrt.pop %v1179
    %v1182 = vrsqrt.pop %v1180
    %v1183 = vmul.f32 %v1167, %v1181
    %v1184 = vmul.f32 %v1168, %v1182
    %v1186 = vlaneseq
    %v1187 = vshrl.u32 %v1186, 7
    %v1188 = vsub.s32 0, %v1187
    %v1189 = vrot.slane %v1157, %v1188
    %v1191 = vmul.f32 %v1183, %v1189
    %v1192 = vmul.f32 %v1184, %v1189
    %v1194 = vlaneseq
    %v1195 = vshrl.u32 %v1194, 7
    %v1196 = vsub.s32 0, %v1195
    %v1197 = vrot.slane %v1158, %v1196
    %v1199 = vadd.f32 %v1191, %v1197
    %v1200 = vadd.f32 %v1192, %v1197
    %v1201 = vpack.c.bf16 %v1200, %v1199
    %s1202 = scalar_lea.vmem %s7, 16
    %v1203 = vld [vmem:[%s1202] sm:$0xf]
    %v1204 = vld [vmem:[%s1202 + $0x4] sm:$0xf]
    %v1205 = vld [vmem:[%s1202 + $0x8] sm:$0xf]
    %v1206 = vld [vmem:[%s1202 + $0xc] sm:$0xf]
    %s1207 = scalar_lea.vmem %s8, 1
    %v1208 = vld [vmem:[%s1207] sm:$0x1]
    %v1210 = vlaneseq
    %v1211 = vshrl.u32 %v1210, 7
    %v1212 = vsub.s32 0, %v1211
    %v1213 = vrot.slane %v1208, %v1212
    %v1219 = vunpack.c.l.b16 %v1203
    %v1220 = vunpack.c.l.b16 %v1204
    %v1221 = vunpack.c.l.b16 %v1205
    %v1222 = vunpack.c.l.b16 %v1206
    %v1223 = vpack.c.b16 %v1220, %v1219
    %v1224 = vpack.c.b16 %v1222, %v1221
    %v1228 = vsel %vm206, %v1201, 0
    %1230 = vmatprep.subr.bf16.mxu0 0
    %1231 = vmatpush1.bf16.msra.mxu0 0
    %1232 = vmatprep.subr.bf16.mxu0 0
    %1233 = vmatpush1.bf16.msra.mxu0 0
    %1234 = vmatprep.subr.bf16.mxu0 0
    %1235 = vmatpush1.bf16.msra.mxu0 0
    %1236 = vmatprep.subr.bf16.mxu0 0
    %1237 = vmatpush1.bf16.msra.mxu0 0
    %1238 = vmatprep.subr.bf16.mxu0 0
    %1239 = vmatpush1.bf16.msra.mxu0 0
    %1240 = vmatprep.subr.bf16.mxu0 0
    %1241 = vmatpush1.bf16.msra.mxu0 0
    %1242 = vmatprep.subr.bf16.mxu0 0
    %1243 = vmatpush1.bf16.msra.mxu0 %v1224
    %1244 = vmatprep.subr.bf16.mxu0 0
    %1245 = vmatpush1.bf16.msra.mxu0 %v1223
    %1246 = vmatprep.subr.bf16.mxu0 0
    %1247 = vmatpush2.bf16.msra.mxu0 0
    %1248 = vmatprep.subr.bf16.mxu0 0
    %1249 = vmatpush2.bf16.msra.mxu0 0
    %1250 = vmatprep.subr.bf16.mxu0 0
    %1251 = vmatpush2.bf16.msra.mxu0 0
    %1252 = vmatprep.subr.bf16.mxu0 0
    %1253 = vmatpush2.bf16.msra.mxu0 0
    %1254 = vmatprep.subr.bf16.mxu0 0
    %1255 = vmatpush2.bf16.msra.mxu0 0
    %1256 = vmatprep.subr.bf16.mxu0 0
    %1257 = vmatpush2.bf16.msra.mxu0 0
    %1258 = vmatprep.subr.bf16.mxu0 0
    %1259 = vmatpush2.bf16.msra.mxu0 0
    %1260 = vmatprep.subr.bf16.mxu0 0
    %1261 = vmatpush2.bf16.msra.mxu0 0
    %1262 = vmatprep.mubr.bf16.mxu0 0
    %1263 = vmatmul.mubr.bf16.gmra.mxu0 %v1228
    %v1264 = vpop.f32.mrf.mxu0
    %v1265 = vadd.f32 %v1213, %v1264
    %v1266 = vpop.f32.mrf.mxu0
    %v1267 = vpop.f32.mrf.mxu0
    %v1268 = vadd.f32 %v1213, %v1267
    %v1269 = vpop.f32.mrf.mxu0
    %1270 = vdwg.mxu0
    %v1271 = vmul.f32 %v1265, %v356
    %v1272 = vmul.f32 %v1268, %v356
    %v1273 = vmul.f32 %v1265, %v362
    %v1274 = vmul.f32 %v1268, %v362
    %v1275 = vmul.f32 %v1265, %v367
    %v1276 = vmul.f32 %v1268, %v367
    %v1277 = vmul.f32 %v1265, %v372
    %v1278 = vmul.f32 %v1268, %v372
    %v1279 = vpack.c.bf16 %v1265, %v1265
    %v1280 = vpack.c.bf16 %v1268, %v1268
    %v1281 = vpack.c.bf16 %v1271, %v1271
    %v1282 = vpack.c.bf16 %v1272, %v1272
    %v1283 = vpack.c.bf16 %v1273, %v1273
    %v1284 = vpack.c.bf16 %v1274, %v1274
    %1286 = vrot.lane.b32.xlu0 %v1281, 96
    %v1287 = vpop.permute.xlu0 %1286
    %v1289 = vsel %vm206, %v1279, 0
    %v1292 = vsel %vm206, %v1287, 0
    %1294 = vmatprep.subr.bf16.mxu0 0
    %1295 = vmatpush1.bf16.xpose.msra.mxu0 0
    %1296 = vmatprep.subr.bf16.mxu0 0
    %1297 = vmatpush1.bf16.xpose.msra.mxu0 0
    %1298 = vmatprep.subr.bf16.mxu0 0
    %1299 = vmatpush1.bf16.xpose.msra.mxu0 0
    %1300 = vmatprep.subr.bf16.mxu0 0
    %1301 = vmatpush1.bf16.xpose.msra.mxu0 0
    %1302 = vmatprep.subr.bf16.mxu0 0
    %1303 = vmatpush1.bf16.xpose.msra.mxu0 0
    %1304 = vmatprep.subr.bf16.mxu0 0
    %1305 = vmatpush1.bf16.xpose.msra.mxu0 0
    %1306 = vmatprep.subr.bf16.mxu0 0
    %1307 = vmatpush1.bf16.xpose.msra.mxu0 0
    %1308 = vmatprep.subr.bf16.mxu0 0
    %1309 = vmatpush1.bf16.xpose.msra.mxu0 %v1292
    %1310 = vmatprep.subr.bf16.mxu0 0
    %1311 = vmatpush2.bf16.xpose.msra.mxu0 0
    %1312 = vmatprep.subr.bf16.mxu0 0
    %1313 = vmatpush2.bf16.xpose.msra.mxu0 0
    %1314 = vmatprep.subr.bf16.mxu0 0
    %1315 = vmatpush2.bf16.xpose.msra.mxu0 0
    %1316 = vmatprep.subr.bf16.mxu0 0
    %1317 = vmatpush2.bf16.xpose.msra.mxu0 0
    %1318 = vmatprep.subr.bf16.mxu0 0
    %1319 = vmatpush2.bf16.xpose.msra.mxu0 0
    %1320 = vmatprep.subr.bf16.mxu0 0
    %1321 = vmatpush2.bf16.xpose.msra.mxu0 0
    %1322 = vmatprep.subr.bf16.mxu0 0
    %1323 = vmatpush2.bf16.xpose.msra.mxu0 0
    %1324 = vmatprep.subr.bf16.mxu0 0
    %1325 = vmatpush2.bf16.xpose.msra.mxu0 0
    %1326 = vmatprep.mubr.bf16.mxu0 0
    %1327 = vmatmul.mubr.bf16.gmra.mxu0 %v1289
    %v1328 = vpop.f32.mrf.mxu0
    %v1329 = vadd.f32 0.0, %v1328
    %v1330 = vpop.f32.mrf.mxu0
    %v1331 = vpop.f32.mrf.mxu0
    %v1332 = vpop.f32.mrf.mxu0
    %1333 = vdwg.mxu0
    %1335 = vrot.lane.b32.xlu0 %v1282, 96
    %v1336 = vpop.permute.xlu0 %1335
    %v1338 = vsel %vm206, %v1280, 0
    %v1341 = vsel %vm206, %v1336, 0
    %1343 = vmatprep.subr.bf16.mxu0 0
    %1344 = vmatpush1.bf16.xpose.msra.mxu0 0
    %1345 = vmatprep.subr.bf16.mxu0 0
    %1346 = vmatpush1.bf16.xpose.msra.mxu0 0
    %1347 = vmatprep.subr.bf16.mxu0 0
    %1348 = vmatpush1.bf16.xpose.msra.mxu0 0
    %1349 = vmatprep.subr.bf16.mxu0 0
    %1350 = vmatpush1.bf16.xpose.msra.mxu0 0
    %1351 = vmatprep.subr.bf16.mxu0 0
    %1352 = vmatpush1.bf16.xpose.msra.mxu0 0
    %1353 = vmatprep.subr.bf16.mxu0 0
    %1354 = vmatpush1.bf16.xpose.msra.mxu0 0
    %1355 = vmatprep.subr.bf16.mxu0 0
    %1356 = vmatpush1.bf16.xpose.msra.mxu0 0
    %1357 = vmatprep.subr.bf16.mxu0 0
    %1358 = vmatpush1.bf16.xpose.msra.mxu0 %v1341
    %1359 = vmatprep.subr.bf16.mxu0 0
    %1360 = vmatpush2.bf16.xpose.msra.mxu0 0
    %1361 = vmatprep.subr.bf16.mxu0 0
    %1362 = vmatpush2.bf16.xpose.msra.mxu0 0
    %1363 = vmatprep.subr.bf16.mxu0 0
    %1364 = vmatpush2.bf16.xpose.msra.mxu0 0
    %1365 = vmatprep.subr.bf16.mxu0 0
    %1366 = vmatpush2.bf16.xpose.msra.mxu0 0
    %1367 = vmatprep.subr.bf16.mxu0 0
    %1368 = vmatpush2.bf16.xpose.msra.mxu0 0
    %1369 = vmatprep.subr.bf16.mxu0 0
    %1370 = vmatpush2.bf16.xpose.msra.mxu0 0
    %1371 = vmatprep.subr.bf16.mxu0 0
    %1372 = vmatpush2.bf16.xpose.msra.mxu0 0
    %1373 = vmatprep.subr.bf16.mxu0 0
    %1374 = vmatpush2.bf16.xpose.msra.mxu0 0
    %1375 = vmatprep.mubr.bf16.mxu0 0
    %1376 = vmatmul.mubr.bf16.gmra.mxu0 %v1338
    %v1377 = vpop.f32.mrf.mxu0
    %v1378 = vadd.f32 0.0, %v1377
    %v1379 = vpop.f32.mrf.mxu0
    %v1380 = vpop.f32.mrf.mxu0
    %v1381 = vpop.f32.mrf.mxu0
    %1382 = vdwg.mxu0
    %1384 = vrot.lane.b32.xlu0 %v1283, 96
    %v1385 = vpop.permute.xlu0 %1384
    %v1387 = vsel %vm206, %v1385, 0
    %1389 = vmatprep.subr.bf16.mxu0 0
    %1390 = vmatpush1.bf16.xpose.msra.mxu0 0
    %1391 = vmatprep.subr.bf16.mxu0 0
    %1392 = vmatpush1.bf16.xpose.msra.mxu0 0
    %1393 = vmatprep.subr.bf16.mxu0 0
    %1394 = vmatpush1.bf16.xpose.msra.mxu0 0
    %1395 = vmatprep.subr.bf16.mxu0 0
    %1396 = vmatpush1.bf16.xpose.msra.mxu0 0
    %1397 = vmatprep.subr.bf16.mxu0 0
    %1398 = vmatpush1.bf16.xpose.msra.mxu0 0
    %1399 = vmatprep.subr.bf16.mxu0 0
    %1400 = vmatpush1.bf16.xpose.msra.mxu0 0
    %1401 = vmatprep.subr.bf16.mxu0 0
    %1402 = vmatpush1.bf16.xpose.msra.mxu0 0
    %1403 = vmatprep.subr.bf16.mxu0 0
    %1404 = vmatpush1.bf16.xpose.msra.mxu0 %v1387
    %1405 = vmatprep.subr.bf16.mxu0 0
    %1406 = vmatpush2.bf16.xpose.msra.mxu0 0
    %1407 = vmatprep.subr.bf16.mxu0 0
    %1408 = vmatpush2.bf16.xpose.msra.mxu0 0
    %1409 = vmatprep.subr.bf16.mxu0 0
    %1410 = vmatpush2.bf16.xpose.msra.mxu0 0
    %1411 = vmatprep.subr.bf16.mxu0 0
    %1412 = vmatpush2.bf16.xpose.msra.mxu0 0
    %1413 = vmatprep.subr.bf16.mxu0 0
    %1414 = vmatpush2.bf16.xpose.msra.mxu0 0
    %1415 = vmatprep.subr.bf16.mxu0 0
    %1416 = vmatpush2.bf16.xpose.msra.mxu0 0
    %1417 = vmatprep.subr.bf16.mxu0 0
    %1418 = vmatpush2.bf16.xpose.msra.mxu0 0
    %1419 = vmatprep.subr.bf16.mxu0 0
    %1420 = vmatpush2.bf16.xpose.msra.mxu0 0
    %1421 = vmatprep.mubr.bf16.mxu0 0
    %1422 = vmatmul.mubr.bf16.gmra.mxu0 %v1289
    %v1423 = vpop.f32.mrf.mxu0
    %v1424 = vadd.f32 0.0, %v1423
    %v1425 = vpop.f32.mrf.mxu0
    %v1426 = vpop.f32.mrf.mxu0
    %v1427 = vpop.f32.mrf.mxu0
    %1428 = vdwg.mxu0
    %1430 = vrot.lane.b32.xlu0 %v1284, 96
    %v1431 = vpop.permute.xlu0 %1430
    %v1433 = vsel %vm206, %v1431, 0
    %1435 = vmatprep.subr.bf16.mxu0 0
    %1436 = vmatpush1.bf16.xpose.msra.mxu0 0
    %1437 = vmatprep.subr.bf16.mxu0 0
    %1438 = vmatpush1.bf16.xpose.msra.mxu0 0
    %1439 = vmatprep.subr.bf16.mxu0 0
    %1440 = vmatpush1.bf16.xpose.msra.mxu0 0
    %1441 = vmatprep.subr.bf16.mxu0 0
    %1442 = vmatpush1.bf16.xpose.msra.mxu0 0
    %1443 = vmatprep.subr.bf16.mxu0 0
    %1444 = vmatpush1.bf16.xpose.msra.mxu0 0
    %1445 = vmatprep.subr.bf16.mxu0 0
    %1446 = vmatpush1.bf16.xpose.msra.mxu0 0
    %1447 = vmatprep.subr.bf16.mxu0 0
    %1448 = vmatpush1.bf16.xpose.msra.mxu0 0
    %1449 = vmatprep.subr.bf16.mxu0 0
    %1450 = vmatpush1.bf16.xpose.msra.mxu0 %v1433
    %1451 = vmatprep.subr.bf16.mxu0 0
    %1452 = vmatpush2.bf16.xpose.msra.mxu0 0
    %1453 = vmatprep.subr.bf16.mxu0 0
    %1454 = vmatpush2.bf16.xpose.msra.mxu0 0
    %1455 = vmatprep.subr.bf16.mxu0 0
    %1456 = vmatpush2.bf16.xpose.msra.mxu0 0
    %1457 = vmatprep.subr.bf16.mxu0 0
    %1458 = vmatpush2.bf16.xpose.msra.mxu0 0
    %1459 = vmatprep.subr.bf16.mxu0 0
    %1460 = vmatpush2.bf16.xpose.msra.mxu0 0
    %1461 = vmatprep.subr.bf16.mxu0 0
    %1462 = vmatpush2.bf16.xpose.msra.mxu0 0
    %1463 = vmatprep.subr.bf16.mxu0 0
    %1464 = vmatpush2.bf16.xpose.msra.mxu0 0
    %1465 = vmatprep.subr.bf16.mxu0 0
    %1466 = vmatpush2.bf16.xpose.msra.mxu0 0
    %1467 = vmatprep.mubr.bf16.mxu0 0
    %1468 = vmatmul.mubr.bf16.gmra.mxu0 %v1338
    %v1469 = vpop.f32.mrf.mxu0
    %v1470 = vadd.f32 0.0, %v1469
    %v1471 = vpop.f32.mrf.mxu0
    %v1472 = vpop.f32.mrf.mxu0
    %v1473 = vpop.f32.mrf.mxu0
    %1474 = vdwg.mxu0
    %v1475 = vmul.f32 %v1329, 0.25
    %v1476 = vmul.f32 %v1378, 0.25
    %v1477 = vmul.f32 %v1424, 0.25
    %v1478 = vmul.f32 %v1470, 0.25
    %v1479 = vadd.f32 %v1475, %v579
    %v1480 = vadd.f32 %v1476, %v583
    %v1481 = vadd.f32 %v1477, %v579
    %v1482 = vadd.f32 %v1478, %v583
    %v1483 = vsel %vm590, %v1479, -inf
    %1484 = vmax.xlane.f32.xlu0 %v1483
    %v1485 = vpop.xlane.xlu0 %1484
    %v1486 = vsel %vm590, %v1480, -inf
    %1487 = vmax.xlane.f32.xlu0 %v1486
    %v1488 = vpop.xlane.xlu0 %1487
    %v1489 = vsel %vm590, %v1481, -inf
    %1490 = vmax.xlane.f32.xlu0 %v1489
    %v1491 = vpop.xlane.xlu0 %1490
    %v1492 = vsel %vm590, %v1482, -inf
    %1493 = vmax.xlane.f32.xlu0 %v1492
    %v1494 = vpop.xlane.xlu0 %1493
    %v1495 = vsub.f32 %v1479, %v1485
    %v1496 = vsub.f32 %v1480, %v1488
    %v1497 = vsub.f32 %v1481, %v1491
    %v1498 = vsub.f32 %v1482, %v1494
    %v1499 = vmul.f32 %v1495, 1.442695
    %v1500 = vpow.pop %v1499
    %v1501 = vmul.f32 %v1496, 1.442695
    %v1502 = vpow.pop %v1501
    %v1503 = vmul.f32 %v1497, 1.442695
    %v1504 = vpow.pop %v1503
    %v1505 = vmul.f32 %v1498, 1.442695
    %v1506 = vpow.pop %v1505
    %v1507 = vsel %vm590, %v1500, 0.0
    %1508 = vadd.xlane.f32.xlu0 %v1507
    %v1509 = vpop.xlane.xlu0 %1508
    %v1510 = vsel %vm590, %v1502, 0.0
    %1511 = vadd.xlane.f32.xlu0 %v1510
    %v1512 = vpop.xlane.xlu0 %1511
    %v1513 = vsel %vm590, %v1504, 0.0
    %1514 = vadd.xlane.f32.xlu0 %v1513
    %v1515 = vpop.xlane.xlu0 %1514
    %v1516 = vsel %vm590, %v1506, 0.0
    %1517 = vadd.xlane.f32.xlu0 %v1516
    %v1518 = vpop.xlane.xlu0 %1517
    %v1519 = vrcp.pop %v1509
    %v1520 = vrcp.pop %v1512
    %v1521 = vrcp.pop %v1515
    %v1522 = vrcp.pop %v1518
    %v1523 = vmul.f32 %v1500, %v1519
    %v1524 = vmul.f32 %v1502, %v1520
    %v1525 = vmul.f32 %v1504, %v1521
    %v1526 = vmul.f32 %v1506, %v1522
    %v1527 = vpack.c.bf16 %v1523, %v1523
    %v1528 = vpack.c.bf16 %v1524, %v1524
    %v1529 = vpack.c.bf16 %v1525, %v1525
    %v1530 = vpack.c.bf16 %v1526, %v1526
    %v1531 = vpack.c.bf16 %v1275, %v1275
    %v1532 = vpack.c.bf16 %v1276, %v1276
    %v1533 = vpack.c.bf16 %v1277, %v1277
    %v1534 = vpack.c.bf16 %v1278, %v1278
    %1536 = vrot.lane.b32.xlu0 %v1531, 64
    %v1537 = vpop.permute.xlu0 %1536
    %v1539 = vsel %vm590, %v1527, 0
    %v1542 = vsel %vm649, %v1537, 0
    %1544 = vmatprep.subr.bf16.mxu0 0
    %1545 = vmatpush1.bf16.msra.mxu0 0
    %1546 = vmatprep.subr.bf16.mxu0 0
    %1547 = vmatpush1.bf16.msra.mxu0 0
    %1548 = vmatprep.subr.bf16.mxu0 0
    %1549 = vmatpush1.bf16.msra.mxu0 0
    %1550 = vmatprep.subr.bf16.mxu0 0
    %1551 = vmatpush1.bf16.msra.mxu0 0
    %1552 = vmatprep.subr.bf16.mxu0 0
    %1553 = vmatpush1.bf16.msra.mxu0 0
    %1554 = vmatprep.subr.bf16.mxu0 0
    %1555 = vmatpush1.bf16.msra.mxu0 0
    %1556 = vmatprep.subr.bf16.mxu0 0
    %1557 = vmatpush1.bf16.msra.mxu0 0
    %1558 = vmatprep.subr.bf16.mxu0 0
    %1559 = vmatpush1.bf16.msra.mxu0 %v1542
    %1560 = vmatprep.subr.bf16.mxu0 0
    %1561 = vmatpush2.bf16.msra.mxu0 0
    %1562 = vmatprep.subr.bf16.mxu0 0
    %1563 = vmatpush2.bf16.msra.mxu0 0
    %1564 = vmatprep.subr.bf16.mxu0 0
    %1565 = vmatpush2.bf16.msra.mxu0 0
    %1566 = vmatprep.subr.bf16.mxu0 0
    %1567 = vmatpush2.bf16.msra.mxu0 0
    %1568 = vmatprep.subr.bf16.mxu0 0
    %1569 = vmatpush2.bf16.msra.mxu0 0
    %1570 = vmatprep.subr.bf16.mxu0 0
    %1571 = vmatpush2.bf16.msra.mxu0 0
    %1572 = vmatprep.subr.bf16.mxu0 0
    %1573 = vmatpush2.bf16.msra.mxu0 0
    %1574 = vmatprep.subr.bf16.mxu0 0
    %1575 = vmatpush2.bf16.msra.mxu0 0
    %1576 = vmatprep.mubr.bf16.mxu0 0
    %1577 = vmatmul.mubr.bf16.gmra.mxu0 %v1539
    %v1578 = vpop.f32.mrf.mxu0
    %v1579 = vadd.f32 0.0, %v1578
    %v1580 = vpop.f32.mrf.mxu0
    %v1581 = vpop.f32.mrf.mxu0
    %v1582 = vpop.f32.mrf.mxu0
    %1583 = vdwg.mxu0
    %1585 = vrot.lane.b32.xlu0 %v1532, 64
    %v1586 = vpop.permute.xlu0 %1585
    %v1588 = vsel %vm590, %v1528, 0
    %v1591 = vsel %vm649, %v1586, 0
    %1593 = vmatprep.subr.bf16.mxu0 0
    %1594 = vmatpush1.bf16.msra.mxu0 0
    %1595 = vmatprep.subr.bf16.mxu0 0
    %1596 = vmatpush1.bf16.msra.mxu0 0
    %1597 = vmatprep.subr.bf16.mxu0 0
    %1598 = vmatpush1.bf16.msra.mxu0 0
    %1599 = vmatprep.subr.bf16.mxu0 0
    %1600 = vmatpush1.bf16.msra.mxu0 0
    %1601 = vmatprep.subr.bf16.mxu0 0
    %1602 = vmatpush1.bf16.msra.mxu0 0
    %1603 = vmatprep.subr.bf16.mxu0 0
    %1604 = vmatpush1.bf16.msra.mxu0 0
    %1605 = vmatprep.subr.bf16.mxu0 0
    %1606 = vmatpush1.bf16.msra.mxu0 0
    %1607 = vmatprep.subr.bf16.mxu0 0
    %1608 = vmatpush1.bf16.msra.mxu0 %v1591
    %1609 = vmatprep.subr.bf16.mxu0 0
    %1610 = vmatpush2.bf16.msra.mxu0 0
    %1611 = vmatprep.subr.bf16.mxu0 0
    %1612 = vmatpush2.bf16.msra.mxu0 0
    %1613 = vmatprep.subr.bf16.mxu0 0
    %1614 = vmatpush2.bf16.msra.mxu0 0
    %1615 = vmatprep.subr.bf16.mxu0 0
    %1616 = vmatpush2.bf16.msra.mxu0 0
    %1617 = vmatprep.subr.bf16.mxu0 0
    %1618 = vmatpush2.bf16.msra.mxu0 0
    %1619 = vmatprep.subr.bf16.mxu0 0
    %1620 = vmatpush2.bf16.msra.mxu0 0
    %1621 = vmatprep.subr.bf16.mxu0 0
    %1622 = vmatpush2.bf16.msra.mxu0 0
    %1623 = vmatprep.subr.bf16.mxu0 0
    %1624 = vmatpush2.bf16.msra.mxu0 0
    %1625 = vmatprep.mubr.bf16.mxu0 0
    %1626 = vmatmul.mubr.bf16.gmra.mxu0 %v1588
    %v1627 = vpop.f32.mrf.mxu0
    %v1628 = vadd.f32 0.0, %v1627
    %v1629 = vpop.f32.mrf.mxu0
    %v1630 = vpop.f32.mrf.mxu0
    %v1631 = vpop.f32.mrf.mxu0
    %1632 = vdwg.mxu0
    %1634 = vrot.lane.b32.xlu0 %v1533, 64
    %v1635 = vpop.permute.xlu0 %1634
    %v1637 = vsel %vm590, %v1529, 0
    %v1640 = vsel %vm649, %v1635, 0
    %1642 = vmatprep.subr.bf16.mxu0 0
    %1643 = vmatpush1.bf16.msra.mxu0 0
    %1644 = vmatprep.subr.bf16.mxu0 0
    %1645 = vmatpush1.bf16.msra.mxu0 0
    %1646 = vmatprep.subr.bf16.mxu0 0
    %1647 = vmatpush1.bf16.msra.mxu0 0
    %1648 = vmatprep.subr.bf16.mxu0 0
    %1649 = vmatpush1.bf16.msra.mxu0 0
    %1650 = vmatprep.subr.bf16.mxu0 0
    %1651 = vmatpush1.bf16.msra.mxu0 0
    %1652 = vmatprep.subr.bf16.mxu0 0
    %1653 = vmatpush1.bf16.msra.mxu0 0
    %1654 = vmatprep.subr.bf16.mxu0 0
    %1655 = vmatpush1.bf16.msra.mxu0 0
    %1656 = vmatprep.subr.bf16.mxu0 0
    %1657 = vmatpush1.bf16.msra.mxu0 %v1640
    %1658 = vmatprep.subr.bf16.mxu0 0
    %1659 = vmatpush2.bf16.msra.mxu0 0
    %1660 = vmatprep.subr.bf16.mxu0 0
    %1661 = vmatpush2.bf16.msra.mxu0 0
    %1662 = vmatprep.subr.bf16.mxu0 0
    %1663 = vmatpush2.bf16.msra.mxu0 0
    %1664 = vmatprep.subr.bf16.mxu0 0
    %1665 = vmatpush2.bf16.msra.mxu0 0
    %1666 = vmatprep.subr.bf16.mxu0 0
    %1667 = vmatpush2.bf16.msra.mxu0 0
    %1668 = vmatprep.subr.bf16.mxu0 0
    %1669 = vmatpush2.bf16.msra.mxu0 0
    %1670 = vmatprep.subr.bf16.mxu0 0
    %1671 = vmatpush2.bf16.msra.mxu0 0
    %1672 = vmatprep.subr.bf16.mxu0 0
    %1673 = vmatpush2.bf16.msra.mxu0 0
    %1674 = vmatprep.mubr.bf16.mxu0 0
    %1675 = vmatmul.mubr.bf16.gmra.mxu0 %v1637
    %v1676 = vpop.f32.mrf.mxu0
    %v1677 = vadd.f32 0.0, %v1676
    %v1678 = vpop.f32.mrf.mxu0
    %v1679 = vpop.f32.mrf.mxu0
    %v1680 = vpop.f32.mrf.mxu0
    %1681 = vdwg.mxu0
    %1683 = vrot.lane.b32.xlu0 %v1534, 64
    %v1684 = vpop.permute.xlu0 %1683
    %v1686 = vsel %vm590, %v1530, 0
    %v1689 = vsel %vm649, %v1684, 0
    %1691 = vmatprep.subr.bf16.mxu0 0
    %1692 = vmatpush1.bf16.msra.mxu0 0
    %1693 = vmatprep.subr.bf16.mxu0 0
    %1694 = vmatpush1.bf16.msra.mxu0 0
    %1695 = vmatprep.subr.bf16.mxu0 0
    %1696 = vmatpush1.bf16.msra.mxu0 0
    %1697 = vmatprep.subr.bf16.mxu0 0
    %1698 = vmatpush1.bf16.msra.mxu0 0
    %1699 = vmatprep.subr.bf16.mxu0 0
    %1700 = vmatpush1.bf16.msra.mxu0 0
    %1701 = vmatprep.subr.bf16.mxu0 0
    %1702 = vmatpush1.bf16.msra.mxu0 0
    %1703 = vmatprep.subr.bf16.mxu0 0
    %1704 = vmatpush1.bf16.msra.mxu0 0
    %1705 = vmatprep.subr.bf16.mxu0 0
    %1706 = vmatpush1.bf16.msra.mxu0 %v1689
    %1707 = vmatprep.subr.bf16.mxu0 0
    %1708 = vmatpush2.bf16.msra.mxu0 0
    %1709 = vmatprep.subr.bf16.mxu0 0
    %1710 = vmatpush2.bf16.msra.mxu0 0
    %1711 = vmatprep.subr.bf16.mxu0 0
    %1712 = vmatpush2.bf16.msra.mxu0 0
    %1713 = vmatprep.subr.bf16.mxu0 0
    %1714 = vmatpush2.bf16.msra.mxu0 0
    %1715 = vmatprep.subr.bf16.mxu0 0
    %1716 = vmatpush2.bf16.msra.mxu0 0
    %1717 = vmatprep.subr.bf16.mxu0 0
    %1718 = vmatpush2.bf16.msra.mxu0 0
    %1719 = vmatprep.subr.bf16.mxu0 0
    %1720 = vmatpush2.bf16.msra.mxu0 0
    %1721 = vmatprep.subr.bf16.mxu0 0
    %1722 = vmatpush2.bf16.msra.mxu0 0
    %1723 = vmatprep.mubr.bf16.mxu0 0
    %1724 = vmatmul.mubr.bf16.gmra.mxu0 %v1686
    %v1725 = vpop.f32.mrf.mxu0
    %v1726 = vadd.f32 0.0, %v1725
    %v1727 = vpop.f32.mrf.mxu0
    %v1728 = vpop.f32.mrf.mxu0
    %v1729 = vpop.f32.mrf.mxu0
    %1730 = vdwg.mxu0
    %v1731 = vadd.f32 %v1579, %v1677
    %v1732 = vadd.f32 %v1628, %v1726
    %v1733 = vpack.c.bf16 %v1732, %v1731
    %s1734 = scalar_lea.vmem %s9, 16
    %v1735 = vld [vmem:[%s1734] sm:$0xf]
    %v1736 = vld [vmem:[%s1734 + $0x4] sm:$0xf]
    %v1737 = vld [vmem:[%s1734 + $0x8] sm:$0xf]
    %v1738 = vld [vmem:[%s1734 + $0xc] sm:$0xf]
    %s1739 = scalar_lea.vmem %s10, 1
    %v1740 = vld [vmem:[%s1739] sm:$0x1]
    %v1742 = vlaneseq
    %v1743 = vshrl.u32 %v1742, 7
    %v1744 = vsub.s32 0, %v1743
    %v1745 = vrot.slane %v1740, %v1744
    %v1751 = vunpack.c.l.b16 %v1735
    %v1752 = vunpack.c.l.b16 %v1736
    %v1753 = vunpack.c.l.b16 %v1737
    %v1754 = vunpack.c.l.b16 %v1738
    %v1755 = vpack.c.b16 %v1752, %v1751
    %v1756 = vpack.c.b16 %v1754, %v1753
    %v1760 = vsel %vm206, %v1733, 0
    %1762 = vmatprep.subr.bf16.mxu0 0
    %1763 = vmatpush1.bf16.msra.mxu0 0
    %1764 = vmatprep.subr.bf16.mxu0 0
    %1765 = vmatpush1.bf16.msra.mxu0 0
    %1766 = vmatprep.subr.bf16.mxu0 0
    %1767 = vmatpush1.bf16.msra.mxu0 0
    %1768 = vmatprep.subr.bf16.mxu0 0
    %1769 = vmatpush1.bf16.msra.mxu0 0
    %1770 = vmatprep.subr.bf16.mxu0 0
    %1771 = vmatpush1.bf16.msra.mxu0 0
    %1772 = vmatprep.subr.bf16.mxu0 0
    %1773 = vmatpush1.bf16.msra.mxu0 0
    %1774 = vmatprep.subr.bf16.mxu0 0
    %1775 = vmatpush1.bf16.msra.mxu0 %v1756
    %1776 = vmatprep.subr.bf16.mxu0 0
    %1777 = vmatpush1.bf16.msra.mxu0 %v1755
    %1778 = vmatprep.subr.bf16.mxu0 0
    %1779 = vmatpush2.bf16.msra.mxu0 0
    %1780 = vmatprep.subr.bf16.mxu0 0
    %1781 = vmatpush2.bf16.msra.mxu0 0
    %1782 = vmatprep.subr.bf16.mxu0 0
    %1783 = vmatpush2.bf16.msra.mxu0 0
    %1784 = vmatprep.subr.bf16.mxu0 0
    %1785 = vmatpush2.bf16.msra.mxu0 0
    %1786 = vmatprep.subr.bf16.mxu0 0
    %1787 = vmatpush2.bf16.msra.mxu0 0
    %1788 = vmatprep.subr.bf16.mxu0 0
    %1789 = vmatpush2.bf16.msra.mxu0 0
    %1790 = vmatprep.subr.bf16.mxu0 0
    %1791 = vmatpush2.bf16.msra.mxu0 0
    %1792 = vmatprep.subr.bf16.mxu0 0
    %1793 = vmatpush2.bf16.msra.mxu0 0
    %1794 = vmatprep.mubr.bf16.mxu0 0
    %1795 = vmatmul.mubr.bf16.gmra.mxu0 %v1760
    %v1796 = vpop.f32.mrf.mxu0
    %v1797 = vadd.f32 %v1745, %v1796
    %v1798 = vpop.f32.mrf.mxu0
    %v1799 = vpop.f32.mrf.mxu0
    %v1800 = vadd.f32 %v1745, %v1799
    %v1801 = vpop.f32.mrf.mxu0
    %1802 = vdwg.mxu0
    %v1803 = vadd.f32 %v1199, %v1797
    %v1804 = vadd.f32 %v1200, %v1800
    %s1805 = scalar_lea.vmem %s11, 1
    %v1806 = vld [vmem:[%s1805] sm:$0x1]
    %s1807 = scalar_lea.vmem %s12, 1
    %v1808 = vld [vmem:[%s1807] sm:$0x1]
    %v1809 = vsel %vm206, %v1803, 0.0
    %1810 = vadd.xlane.f32.xlu0 %v1809
    %v1811 = vpop.xlane.xlu0 %1810
    %v1812 = vsel %vm206, %v1804, 0.0
    %1813 = vadd.xlane.f32.xlu0 %v1812
    %v1814 = vpop.xlane.xlu0 %1813
    %v1815 = vmul.f32 %v1811, %v213
    %v1816 = vmul.f32 %v1814, %v213
    %v1817 = vsub.f32 %v1803, %v1815
    %v1818 = vsub.f32 %v1804, %v1816
    %v1819 = vmul.f32 %v1817, %v1817
    %v1820 = vmul.f32 %v1818, %v1818
    %v1821 = vsel %vm206, %v1819, 0.0
    %1822 = vadd.xlane.f32.xlu0 %v1821
    %v1823 = vpop.xlane.xlu0 %1822
    %v1824 = vsel %vm206, %v1820, 0.0
    %1825 = vadd.xlane.f32.xlu0 %v1824
    %v1826 = vpop.xlane.xlu0 %1825
    %v1827 = vmul.f32 %v1823, %v213
    %v1828 = vmul.f32 %v1826, %v213
    %v1829 = vadd.f32 %v1827, 1e-12
    %v1830 = vadd.f32 %v1828, 1e-12
    %v1831 = vrsqrt.pop %v1829
    %v1832 = vrsqrt.pop %v1830
    %v1833 = vmul.f32 %v1817, %v1831
    %v1834 = vmul.f32 %v1818, %v1832
    %v1836 = vlaneseq
    %v1837 = vshrl.u32 %v1836, 7
    %v1838 = vsub.s32 0, %v1837
    %v1839 = vrot.slane %v1806, %v1838
    %v1841 = vmul.f32 %v1833, %v1839
    %v1842 = vmul.f32 %v1834, %v1839
    %v1844 = vlaneseq
    %v1845 = vshrl.u32 %v1844, 7
    %v1846 = vsub.s32 0, %v1845
    %v1847 = vrot.slane %v1808, %v1846
    %v1849 = vadd.f32 %v1841, %v1847
    %v1850 = vadd.f32 %v1842, %v1847
    %v1851 = vpack.c.bf16 %v1850, %v1849
    %s1852 = scalar_lea.vmem %s13, 16
    %v1853 = vld [vmem:[%s1852] sm:$0xf]
    %v1854 = vld [vmem:[%s1852 + $0x4] sm:$0xf]
    %v1855 = vld [vmem:[%s1852 + $0x8] sm:$0xf]
    %v1856 = vld [vmem:[%s1852 + $0xc] sm:$0xf]
    %s1857 = scalar_lea.vmem %s14, 1
    %v1858 = vld [vmem:[%s1857] sm:$0x1]
    %v1860 = vlaneseq
    %v1861 = vshrl.u32 %v1860, 7
    %v1862 = vsub.s32 0, %v1861
    %v1863 = vrot.slane %v1858, %v1862
    %v1869 = vunpack.c.l.b16 %v1853
    %v1870 = vunpack.c.l.b16 %v1854
    %v1871 = vunpack.c.l.b16 %v1855
    %v1872 = vunpack.c.l.b16 %v1856
    %v1873 = vpack.c.b16 %v1870, %v1869
    %v1874 = vpack.c.b16 %v1872, %v1871
    %v1878 = vsel %vm206, %v1851, 0
    %1880 = vmatprep.subr.bf16.mxu0 0
    %1881 = vmatpush1.bf16.msra.mxu0 0
    %1882 = vmatprep.subr.bf16.mxu0 0
    %1883 = vmatpush1.bf16.msra.mxu0 0
    %1884 = vmatprep.subr.bf16.mxu0 0
    %1885 = vmatpush1.bf16.msra.mxu0 0
    %1886 = vmatprep.subr.bf16.mxu0 0
    %1887 = vmatpush1.bf16.msra.mxu0 0
    %1888 = vmatprep.subr.bf16.mxu0 0
    %1889 = vmatpush1.bf16.msra.mxu0 0
    %1890 = vmatprep.subr.bf16.mxu0 0
    %1891 = vmatpush1.bf16.msra.mxu0 0
    %1892 = vmatprep.subr.bf16.mxu0 0
    %1893 = vmatpush1.bf16.msra.mxu0 %v1874
    %1894 = vmatprep.subr.bf16.mxu0 0
    %1895 = vmatpush1.bf16.msra.mxu0 %v1873
    %1896 = vmatprep.subr.bf16.mxu0 0
    %1897 = vmatpush2.bf16.msra.mxu0 0
    %1898 = vmatprep.subr.bf16.mxu0 0
    %1899 = vmatpush2.bf16.msra.mxu0 0
    %1900 = vmatprep.subr.bf16.mxu0 0
    %1901 = vmatpush2.bf16.msra.mxu0 0
    %1902 = vmatprep.subr.bf16.mxu0 0
    %1903 = vmatpush2.bf16.msra.mxu0 0
    %1904 = vmatprep.subr.bf16.mxu0 0
    %1905 = vmatpush2.bf16.msra.mxu0 0
    %1906 = vmatprep.subr.bf16.mxu0 0
    %1907 = vmatpush2.bf16.msra.mxu0 0
    %1908 = vmatprep.subr.bf16.mxu0 0
    %1909 = vmatpush2.bf16.msra.mxu0 0
    %1910 = vmatprep.subr.bf16.mxu0 0
    %1911 = vmatpush2.bf16.msra.mxu0 0
    %1912 = vmatprep.mubr.bf16.mxu0 0
    %1913 = vmatmul.mubr.bf16.gmra.mxu0 %v1878
    %v1914 = vpop.f32.mrf.mxu0
    %v1915 = vadd.f32 %v1863, %v1914
    %v1916 = vpop.f32.mrf.mxu0
    %v1917 = vpop.f32.mrf.mxu0
    %v1918 = vadd.f32 %v1863, %v1917
    %v1919 = vpop.f32.mrf.mxu0
    %1920 = vdwg.mxu0
    %v1921 = vmul.f32 %v1915, %v1915
    %v1922 = vmul.f32 %v1918, %v1918
    %v1923 = vmul.f32 %v1915, %v1921
    %v1924 = vmul.f32 %v1918, %v1922
    %v1925 = vmul.f32 %v1923, 0.044715
    %v1926 = vmul.f32 %v1924, 0.044715
    %v1927 = vadd.f32 %v1915, %v1925
    %v1928 = vadd.f32 %v1918, %v1926
    %v1929 = vmul.f32 %v1927, 0.7978846
    %v1930 = vmul.f32 %v1928, 0.7978846
    %v1931 = vtanh.pop %v1929
    %v1932 = vtanh.pop %v1930
    %v1933 = vadd.f32 %v1931, 1.0
    %v1934 = vadd.f32 %v1932, 1.0
    %v1935 = vmul.f32 %v1933, 0.5
    %v1936 = vmul.f32 %v1934, 0.5
    %v1937 = vmul.f32 %v1915, %v1935
    %v1938 = vmul.f32 %v1918, %v1936
    %v1939 = vpack.c.bf16 %v1938, %v1937
    %s1940 = scalar_lea.vmem %s15, 64
    %v1941 = vld [vmem:[%s1940] sm:$0xf]
    %v1942 = vld [vmem:[%s1940 + $0x4] sm:$0xf]
    %v1943 = vld [vmem:[%s1940 + $0x8] sm:$0xf]
    %v1944 = vld [vmem:[%s1940 + $0xc] sm:$0xf]
    %v1945 = vld [vmem:[%s1940 + $0x10] sm:$0xf]
    %v1946 = vld [vmem:[%s1940 + $0x14] sm:$0xf]
    %v1947 = vld [vmem:[%s1940 + $0x18] sm:$0xf]
    %v1948 = vld [vmem:[%s1940 + $0x1c] sm:$0xf]
    %v1949 = vld [vmem:[%s1940 + $0x20] sm:$0xf]
    %v1950 = vld [vmem:[%s1940 + $0x24] sm:$0xf]
    %v1951 = vld [vmem:[%s1940 + $0x28] sm:$0xf]
    %v1952 = vld [vmem:[%s1940 + $0x2c] sm:$0xf]
    %v1953 = vld [vmem:[%s1940 + $0x30] sm:$0xf]
    %v1954 = vld [vmem:[%s1940 + $0x34] sm:$0xf]
    %v1955 = vld [vmem:[%s1940 + $0x38] sm:$0xf]
    %v1956 = vld [vmem:[%s1940 + $0x3c] sm:$0xf]
    %s1957 = scalar_lea.vmem %s16, 1
    %v1958 = vld [vmem:[%s1957] sm:$0x1]
    %v1960 = vlaneseq
    %v1961 = vshrl.u32 %v1960, 7
    %v1962 = vsub.s32 0, %v1961
    %v1963 = vrot.slane %v1958, %v1962
    %v1981 = vunpack.c.l.b16 %v1941
    %v1982 = vunpack.c.l.b16 %v1942
    %v1983 = vunpack.c.l.b16 %v1943
    %v1984 = vunpack.c.l.b16 %v1944
    %v1985 = vunpack.c.l.b16 %v1945
    %v1986 = vunpack.c.l.b16 %v1946
    %v1987 = vunpack.c.l.b16 %v1947
    %v1988 = vunpack.c.l.b16 %v1948
    %v1989 = vunpack.c.l.b16 %v1949
    %v1990 = vunpack.c.l.b16 %v1950
    %v1991 = vunpack.c.l.b16 %v1951
    %v1992 = vunpack.c.l.b16 %v1952
    %v1993 = vunpack.c.l.b16 %v1953
    %v1994 = vunpack.c.l.b16 %v1954
    %v1995 = vunpack.c.l.b16 %v1955
    %v1996 = vunpack.c.l.b16 %v1956
    %v1997 = vpack.c.b16 %v1982, %v1981
    %v1998 = vpack.c.b16 %v1984, %v1983
    %v1999 = vpack.c.b16 %v1986, %v1985
    %v2000 = vpack.c.b16 %v1988, %v1987
    %v2001 = vpack.c.b16 %v1990, %v1989
    %v2002 = vpack.c.b16 %v1992, %v1991
    %v2003 = vpack.c.b16 %v1994, %v1993
    %v2004 = vpack.c.b16 %v1996, %v1995
    %2013 = vmatprep.subr.bf16.mxu0 0
    %2014 = vmatpush1.bf16.msra.mxu0 %v2004
    %2015 = vmatprep.subr.bf16.mxu0 0
    %2016 = vmatpush1.bf16.msra.mxu0 %v2003
    %2017 = vmatprep.subr.bf16.mxu0 0
    %2018 = vmatpush1.bf16.msra.mxu0 %v2002
    %2019 = vmatprep.subr.bf16.mxu0 0
    %2020 = vmatpush1.bf16.msra.mxu0 %v2001
    %2021 = vmatprep.subr.bf16.mxu0 0
    %2022 = vmatpush1.bf16.msra.mxu0 %v2000
    %2023 = vmatprep.subr.bf16.mxu0 0
    %2024 = vmatpush1.bf16.msra.mxu0 %v1999
    %2025 = vmatprep.subr.bf16.mxu0 0
    %2026 = vmatpush1.bf16.msra.mxu0 %v1998
    %2027 = vmatprep.subr.bf16.mxu0 0
    %2028 = vmatpush1.bf16.msra.mxu0 %v1997
    %2029 = vmatprep.subr.bf16.mxu0 0
    %2030 = vmatpush2.bf16.msra.mxu0 0
    %2031 = vmatprep.subr.bf16.mxu0 0
    %2032 = vmatpush2.bf16.msra.mxu0 0
    %2033 = vmatprep.subr.bf16.mxu0 0
    %2034 = vmatpush2.bf16.msra.mxu0 0
    %2035 = vmatprep.subr.bf16.mxu0 0
    %2036 = vmatpush2.bf16.msra.mxu0 0
    %2037 = vmatprep.subr.bf16.mxu0 0
    %2038 = vmatpush2.bf16.msra.mxu0 0
    %2039 = vmatprep.subr.bf16.mxu0 0
    %2040 = vmatpush2.bf16.msra.mxu0 0
    %2041 = vmatprep.subr.bf16.mxu0 0
    %2042 = vmatpush2.bf16.msra.mxu0 0
    %2043 = vmatprep.subr.bf16.mxu0 0
    %2044 = vmatpush2.bf16.msra.mxu0 0
    %2045 = vmatprep.mubr.bf16.mxu0 0
    %2046 = vmatmul.mubr.bf16.gmra.mxu0 %v1939
    %v2047 = vpop.f32.mrf.mxu0
    %v2048 = vadd.f32 %v1963, %v2047
    %v2049 = vpop.f32.mrf.mxu0
    %v2050 = vpop.f32.mrf.mxu0
    %v2051 = vadd.f32 %v1963, %v2050
    %v2052 = vpop.f32.mrf.mxu0
    %2053 = vdwg.mxu0
    %v2054 = vadd.f32 %v1849, %v2048
    %v2055 = vadd.f32 %v1850, %v2051
    %s2056 = scalar_lea.vmem %s17, 1
    %v2057 = vld [vmem:[%s2056] sm:$0x1]
    %s2058 = scalar_lea.vmem %s18, 1
    %v2059 = vld [vmem:[%s2058] sm:$0x1]
    %v2060 = vsel %vm206, %v2054, 0.0
    %2061 = vadd.xlane.f32.xlu0 %v2060
    %v2062 = vpop.xlane.xlu0 %2061
    %v2063 = vsel %vm206, %v2055, 0.0
    %2064 = vadd.xlane.f32.xlu0 %v2063
    %v2065 = vpop.xlane.xlu0 %2064
    %v2066 = vmul.f32 %v2062, %v213
    %v2067 = vmul.f32 %v2065, %v213
    %v2068 = vsub.f32 %v2054, %v2066
    %v2069 = vsub.f32 %v2055, %v2067
    %v2070 = vmul.f32 %v2068, %v2068
    %v2071 = vmul.f32 %v2069, %v2069
    %v2072 = vsel %vm206, %v2070, 0.0
    %2073 = vadd.xlane.f32.xlu0 %v2072
    %v2074 = vpop.xlane.xlu0 %2073
    %v2075 = vsel %vm206, %v2071, 0.0
    %2076 = vadd.xlane.f32.xlu0 %v2075
    %v2077 = vpop.xlane.xlu0 %2076
    %v2078 = vmul.f32 %v2074, %v213
    %v2079 = vmul.f32 %v2077, %v213
    %v2080 = vadd.f32 %v2078, 1e-12
    %v2081 = vadd.f32 %v2079, 1e-12
    %v2082 = vrsqrt.pop %v2080
    %v2083 = vrsqrt.pop %v2081
    %v2084 = vmul.f32 %v2068, %v2082
    %v2085 = vmul.f32 %v2069, %v2083
    %v2087 = vlaneseq
    %v2088 = vshrl.u32 %v2087, 7
    %v2089 = vsub.s32 0, %v2088
    %v2090 = vrot.slane %v2057, %v2089
    %v2092 = vmul.f32 %v2084, %v2090
    %v2093 = vmul.f32 %v2085, %v2090
    %v2095 = vlaneseq
    %v2096 = vshrl.u32 %v2095, 7
    %v2097 = vsub.s32 0, %v2096
    %v2098 = vrot.slane %v2059, %v2097
    %v2100 = vadd.f32 %v2092, %v2098
    %v2101 = vadd.f32 %v2093, %v2098
    %v2102 = vpack.c.bf16 %v2101, %v2100
    %v2103 = vld [vmem:[%s19] sm:$0xf]
    %v2104 = vld [vmem:[%s19 + $0x4] sm:$0xf]
    %v2105 = vld [vmem:[%s19 + $0x8] sm:$0xf]
    %v2106 = vld [vmem:[%s19 + $0xc] sm:$0xf]
    %v2107 = vld [vmem:[%s20] sm:$0x1]
    %v2109 = vlaneseq
    %v2110 = vshrl.u32 %v2109, 7
    %v2111 = vsub.s32 0, %v2110
    %v2112 = vrot.slane %v2107, %v2111
    %v2118 = vunpack.c.l.b16 %v2103
    %v2119 = vunpack.c.l.b16 %v2104
    %v2120 = vunpack.c.l.b16 %v2105
    %v2121 = vunpack.c.l.b16 %v2106
    %v2122 = vpack.c.b16 %v2119, %v2118
    %v2123 = vpack.c.b16 %v2121, %v2120
    %v2127 = vsel %vm206, %v2102, 0
    %2129 = vmatprep.subr.bf16.mxu0 0
    %2130 = vmatpush1.bf16.msra.mxu0 0
    %2131 = vmatprep.subr.bf16.mxu0 0
    %2132 = vmatpush1.bf16.msra.mxu0 0
    %2133 = vmatprep.subr.bf16.mxu0 0
    %2134 = vmatpush1.bf16.msra.mxu0 0
    %2135 = vmatprep.subr.bf16.mxu0 0
    %2136 = vmatpush1.bf16.msra.mxu0 0
    %2137 = vmatprep.subr.bf16.mxu0 0
    %2138 = vmatpush1.bf16.msra.mxu0 0
    %2139 = vmatprep.subr.bf16.mxu0 0
    %2140 = vmatpush1.bf16.msra.mxu0 0
    %2141 = vmatprep.subr.bf16.mxu0 0
    %2142 = vmatpush1.bf16.msra.mxu0 %v2123
    %2143 = vmatprep.subr.bf16.mxu0 0
    %2144 = vmatpush1.bf16.msra.mxu0 %v2122
    %2145 = vmatprep.subr.bf16.mxu0 0
    %2146 = vmatpush2.bf16.msra.mxu0 0
    %2147 = vmatprep.subr.bf16.mxu0 0
    %2148 = vmatpush2.bf16.msra.mxu0 0
    %2149 = vmatprep.subr.bf16.mxu0 0
    %2150 = vmatpush2.bf16.msra.mxu0 0
    %2151 = vmatprep.subr.bf16.mxu0 0
    %2152 = vmatpush2.bf16.msra.mxu0 0
    %2153 = vmatprep.subr.bf16.mxu0 0
    %2154 = vmatpush2.bf16.msra.mxu0 0
    %2155 = vmatprep.subr.bf16.mxu0 0
    %2156 = vmatpush2.bf16.msra.mxu0 0
    %2157 = vmatprep.subr.bf16.mxu0 0
    %2158 = vmatpush2.bf16.msra.mxu0 0
    %2159 = vmatprep.subr.bf16.mxu0 0
    %2160 = vmatpush2.bf16.msra.mxu0 0
    %2161 = vmatprep.mubr.bf16.mxu0 0
    %2162 = vmatmul.mubr.bf16.gmra.mxu0 %v2127
    %v2163 = vpop.f32.mrf.mxu0
    %v2164 = vadd.f32 %v2112, %v2163
    %v2165 = vpop.f32.mrf.mxu0
    %v2166 = vpop.f32.mrf.mxu0
    %v2167 = vadd.f32 %v2112, %v2166
    %v2168 = vpop.f32.mrf.mxu0
    %2169 = vdwg.mxu0
    %v2170 = vlaneseq
    %v2171 = vshrl.u32 %v2170, 7
    %vm2172 = vcmp.lt.s32.totalorder %v89, 4
    %v2175 = vrot.slane %v2167, 7
    %vm2176 = vcmask 1041409
    %v2177 = vsel %vm2176, %v2175, %v2164
    %v2179 = vsel %vm2172, %v2177, -1e+30
    %vm2180 = vcmask 1041408
    %v2181 = vsel %vm2180, %v2179, -inf
    %2182 = vmax.xlane.f32.xlu0 %v2181
    %v2183 = vpop.xlane.xlu0 %2182
    %v2184 = vsub.f32 %v2179, %v2183
    %v2185 = vmul.f32 %v2184, 1.442695
    %v2186 = vpow.pop %v2185
    %v2187 = vsel %vm2180, %v2186, 0.0
    %2188 = vadd.xlane.f32.xlu0 %v2187
    %v2189 = vpop.xlane.xlu0 %2188
    %v2190 = vlog2.pop %v2189
    %v2191 = vmul.f32 %v2190, 0.6931472
    %v2192 = vadd.f32 %v2191, %v2183
    %vm2193 = vcmp.eq.s32.totalorder %v2171, 0
    %s2194 = sld [smem:[#allocation2]]
    %v2195 = vstv %s2194
    %vm2196 = vcmp.eq.s32.totalorder %v89, %v2195
    %vm2197 = vmand %vm2193, %vm2196
    %v2198 = vsel %vm2197, 1.0, 0.0
    %vm2199 = vcmp.eq.s32.totalorder %v2171, 1
    %s2200 = sld [smem:[#allocation2 + $0x1]]
    %v2201 = vstv %s2200
    %vm2202 = vcmp.eq.s32.totalorder %v89, %v2201
    %vm2203 = vmand %vm2199, %vm2202
    %v2204 = vsel %vm2203, 1.0, %v2198
    %v2205 = vmul.f32 %v2204, %v2177
    %v2206 = vsel %vm2180, %v2205, 0.0
    %2207 = vadd.xlane.f32.xlu0 %v2206
    %v2208 = vpop.xlane.xlu0 %2207
    %v2209 = vsub.f32 %v2192, %v2208
    %vm2210 = vcmp.eq.s32.totalorder %v89, 4
    %v2211 = vsel %vm2210, %v2209, 0.0
    %v2212 = vsel %vm2172, %v2177, %v2211
    %2213 = vst [vmem:[#allocation5] sm:$0x3] %v2212
    // Predicated region
    $region94: #{tpu_custom_call.1} parent=1 // pred_check
      _
    $region95: #{tpu_custom_call.1} parent=1 // pred_check_branch
      %2215 = sbr.rel (0) target = $region97
    $region96: #{tpu_custom_call.1} parent=1 // pred_region
      %s2217 = ssub.s32 32, 32
      %2218 = vsyncadd [#allocation3], %s2217
      %s2220 = sshll.u32 [#allocation5], 4
      %s2221 = int_to_ptr.vmem [resolvable:$true] %s2220
      %2223 = dma.vmem_to_hbm [thread:$0]  %s2221, 32, %s22, [#allocation3]
    $region97: #{tpu_custom_call.1} parent=1 // pred_fallthru
      _
    // Predicated region
    $region98: #{tpu_custom_call.1} parent=1 // pred_check
      _
    $region99: #{tpu_custom_call.1} parent=1 // pred_check_branch
      %2225 = sbr.rel (0) target = $region101
    $region100: #{tpu_custom_call.1} parent=1 // pred_region
      %2226 = dma.done [#allocation3], 32
    $region101: #{tpu_custom_call.1} parent=1 // pred_fallthru
      _
    %2227 = vsyncpa [#allocation3], 1
    %2228 = vsyncpa [#allocation4], 1

</llo_original>
